<compile_context>
chip_gen: v5e
topology: v5e:2x2
jax: 0.10.0
libtpu: 0.0.40
codegen_flags: <defaults>
</compile_context>

<pallas_src>
import functools
import math

import jax
import jax.numpy as jnp
from jax.experimental import pallas as pl
from jax.experimental.pallas import tpu as pltpu


# ----------------------------------------------------------------------------
# Fused EncoderLayer kernel: one grid step per (batch, query-tile)
# ----------------------------------------------------------------------------
def encoder_layer_kernel(x_full_ref, x_tile_ref, mask_ref,
                         g0_ref, be0_ref, g1_ref, be1_ref,
                         wq_ref, bq_ref, wk_ref, bk_ref, wv_ref, bv_ref,
                         wo_ref, bo_ref,
                         w1_ref, b1_ref, w2_ref, b2_ref,
                         o_ref,
                         k_scr, v_scr, ctx_scr,
                         *, num_heads, head_dim, eps):
    qi = pl.program_id(1)

    def layer_norm(v, g_ref, b_ref):
        # Matches the spec's custom LayerNorm: unbiased std (/(D-1)), eps added to std.
        d = v.shape[-1]
        mean = jnp.mean(v, axis=-1, keepdims=True)
        var_unbiased = jnp.sum((v - mean) ** 2, axis=-1, keepdims=True) / (d - 1)
        std = jnp.sqrt(var_unbiased)
        inv = pl.reciprocal(std + eps, approx=True)
        return g_ref[...] * (v - mean) * inv + b_ref[...]

    # ---- K / V for the full sequence: computed once per batch element, kept in VMEM ----
    @pl.when(qi == 0)
    def _():
        x_full = x_full_ref[0].astype(jnp.float32)                       # (T, D)
        nx_full = layer_norm(x_full, g0_ref, be0_ref).astype(jnp.bfloat16)
        k_scr[...] = (jnp.dot(nx_full, wk_ref[...],
                              preferred_element_type=jnp.float32)
                      + bk_ref[...]).astype(jnp.bfloat16)
        v_scr[...] = (jnp.dot(nx_full, wv_ref[...],
                              preferred_element_type=jnp.float32)
                      + bv_ref[...]).astype(jnp.bfloat16)

    # ---------------- sublayer 0: multi-head self-attention (query tile) ----------------
    x_t = x_tile_ref[0].astype(jnp.float32)                              # (TQ, D)
    nx_t = layer_norm(x_t, g0_ref, be0_ref).astype(jnp.bfloat16)

    scale = 1.0 / math.sqrt(head_dim)
    q = ((jnp.dot(nx_t, wq_ref[...], preferred_element_type=jnp.float32)
          + bq_ref[...]) * scale).astype(jnp.bfloat16)                   # scale folded into q

    # Mask bias computed once; heads only do an add.
    mask_bias = jnp.where(mask_ref[0] == 0, -1e9, 0.0).astype(jnp.float32)  # (1|TQ, T)

    for h in range(num_heads):          # static unroll; intermediates die at scratch write
        sl = slice(h * head_dim, (h + 1) * head_dim)
        s = jax.lax.dot_general(q[:, sl], k_scr[:, sl],
                                (((1,), (1,)), ((), ())),
                                preferred_element_type=jnp.float32)      # (TQ, T)
        s = s + mask_bias
        s = s - jnp.max(s, axis=-1, keepdims=True)
        e = jnp.exp(s)
        p = (e * pl.reciprocal(jnp.sum(e, axis=-1, keepdims=True), approx=True)
             ).astype(jnp.bfloat16)
        ctx_scr[:, sl] = jnp.dot(p, v_scr[:, sl],
                                 preferred_element_type=jnp.float32)

    attn = (jnp.dot(ctx_scr[...].astype(jnp.bfloat16), wo_ref[...],
                    preferred_element_type=jnp.float32) + bo_ref[...])
    x1 = x_t + attn                                                      # residual 0

    # ---------------- sublayer 1: position-wise feed forward ----------------
    nx1 = layer_norm(x1, g1_ref, be1_ref).astype(jnp.bfloat16)
    h1 = jnp.maximum(jnp.dot(nx1, w1_ref[...], preferred_element_type=jnp.float32)
                     + b1_ref[...], 0.0).astype(jnp.bfloat16)
    ffn = jnp.dot(h1, w2_ref[...], preferred_element_type=jnp.float32) + b2_ref[...]

    o_ref[0] = (x1 + ffn).astype(o_ref.dtype)                            # residual 1


def encoder_layer_forward(x, mask, params, num_heads, eps=1e-6):
    B, T, D = x.shape
    mq = mask.shape[1]
    assert mq in (1, T), "mask must broadcast over queries (mq == 1) or be per-query (mq == T)"
    assert D % num_heads == 0
    head_dim = D // num_heads

    # Query-tile size: largest power-of-two tile (<= 256) dividing T, else the whole sequence.
    TQ = T
    for cand in (256, 128, 64, 32, 16, 8):
        if cand <= T and T % cand == 0:
            TQ = cand
            break
    NQ = T // TQ

    g0, be0 = params["ln0"]
    g1, be1 = params["ln1"]
    wq, bq, wk, bk, wv, bv, wo, bo = params["self_attn"]
    w1, b1, w2, b2 = params["ffn"]

    bf = lambda w: w.astype(jnp.bfloat16)      # matmul weights in bf16 (halves DMA + VMEM)
    flat = (g0, be0, g1, be1,
            bf(wq), bq, bf(wk), bk, bf(wv), bv, bf(wo), bo,
            bf(w1), b1, bf(w2), b2)
    d_ff = w1.shape[1]

    kern = functools.partial(encoder_layer_kernel,
                             num_heads=num_heads, head_dim=head_dim, eps=eps)

    def full_spec(a):  # whole-array block, replicated across the grid (constant index_map)
        return pl.BlockSpec(a.shape, lambda b, q: (0,) * a.ndim)

    mask_spec = (pl.BlockSpec((1, 1, T), lambda b, q: (b, 0, 0)) if mq == 1
                 else pl.BlockSpec((1, TQ, T), lambda b, q: (b, q, 0)))

    in_specs = [
        pl.BlockSpec((1, T, D), lambda b, q: (b, 0, 0)),    # full-sequence x (K/V source)
        pl.BlockSpec((1, TQ, D), lambda b, q: (b, q, 0)),   # query tile of x
        mask_spec,
    ] + [full_spec(w) for w in flat]

    scratch_shapes = [
        pltpu.VMEM((T, D), jnp.bfloat16),    # K (full sequence, resident across q-tiles)
        pltpu.VMEM((T, D), jnp.bfloat16),    # V
        pltpu.VMEM((TQ, D), jnp.float32),    # per-tile concatenated head contexts
    ]

    # --- explicit VMEM budget (weights double-buffered + tiles + scratch + working set) ---
    itemsize = lambda a: a.dtype.itemsize
    weight_bytes = sum(int(w.size) * itemsize(w) for w in flat)
    tile_bytes = (T * D + 2 * TQ * D) * itemsize(x) + (1 if mq == 1 else TQ) * T * itemsize(mask)
    scratch_bytes = 2 * T * D * 2 + TQ * D * 4
    work_bytes = 4 * TQ * T * 4 + 8 * max(T, TQ) * max(D, d_ff) * 4
    est = 2 * (weight_bytes + tile_bytes) + scratch_bytes + work_bytes + (2 << 20)
    vmem_limit = int(min(max(est, 16 << 20), 64 << 20))

    cost = pl.CostEstimate(
        flops=int(2 * B * T * (4 * D * D + 2 * T * D + 2 * D * d_ff)),
        transcendentals=int(B * num_heads * T * T),
        bytes_accessed=int(3 * x.size * itemsize(x) + mask.size * itemsize(mask)
                           + weight_bytes),
    )

    return pl.pallas_call(
        kern,
        out_shape=jax.ShapeDtypeStruct((B, T, D), x.dtype),
        grid=(B, NQ),
        in_specs=in_specs,
        out_specs=pl.BlockSpec((1, TQ, D), lambda b, q: (b, q, 0)),
        scratch_shapes=scratch_shapes,
        compiler_params=pltpu.CompilerParams(
            dimension_semantics=("parallel", "arbitrary"),
            vmem_limit_bytes=vmem_limit),
        cost_estimate=cost,
    )(x, x, mask, *flat)


# ----------------------------------------------------------------------------
# Deterministic parameter construction
# ----------------------------------------------------------------------------
def xavier_uniform(key, fan_in, fan_out):
    limit = math.sqrt(6.0 / (fan_in + fan_out))
    return jax.random.uniform(key, (fan_in, fan_out), jnp.float32, -limit, limit)


def make_params(key, d_model, d_ff):
    keys = jax.random.split(key, 8)

    # clones() deep-copies the SublayerConnection -> two distinct LayerNorms.
    ln0 = (jnp.ones((1, d_model), jnp.float32), jnp.zeros((1, d_model), jnp.float32))
    ln1 = (jnp.ones((1, d_model), jnp.float32), jnp.zeros((1, d_model), jnp.float32))

    # Attention: 4 linear layers, weights stored as (in, out) so y = x @ W + b.
    ws = [xavier_uniform(k, d_model, d_model) for k in keys[0:4]]
    bs = [jnp.zeros((1, d_model), jnp.float32) for _ in range(4)]
    self_attn = (ws[0], bs[0], ws[1], bs[1], ws[2], bs[2], ws[3], bs[3])

    ffn = (
        xavier_uniform(keys[4], d_model, d_ff),
        jnp.zeros((1, d_ff), jnp.float32),
        xavier_uniform(keys[5], d_ff, d_model),
        jnp.zeros((1, d_model), jnp.float32),
    )
    return {"ln0": ln0, "ln1": ln1, "self_attn": self_attn, "ffn": ffn}


if __name__ == "__main__":
    B, T = 2, 8
    D, H, D_FF = 32, 4, 64

    root = jax.random.PRNGKey(0)
    k_x, k_p = jax.random.split(root, 2)

    x = jax.random.normal(k_x, (B, T, D), jnp.float32)
    mask = jnp.ones((B, 1, T), jnp.float32)
    mask = mask.at[1, 0, T - 2:].set(0.0)        # mask a couple of key positions

    params = make_params(k_p, D, D_FF)

    out = encoder_layer_forward(x, mask, params, num_heads=H)
    jax.block_until_ready(out)

    assert out.shape == (B, T, D)
    assert bool(jnp.all(jnp.isfinite(out)))
    print("KERNEL_OK")
</pallas_src>

<mosaic_0001>
module attributes {stable_mosaic.version = 11 : i64} {
  func.func @encoder_layer_kernel(%arg0: i32, %arg1: i32, %arg2: memref<1x8x32xf32, #tpu.memory_space<vmem>>, %arg3: memref<1x8x32xf32, #tpu.memory_space<vmem>>, %arg4: memref<1x1x8xf32, #tpu.memory_space<vmem>>, %arg5: memref<1x32xf32, #tpu.memory_space<vmem>>, %arg6: memref<1x32xf32, #tpu.memory_space<vmem>>, %arg7: memref<1x32xf32, #tpu.memory_space<vmem>>, %arg8: memref<1x32xf32, #tpu.memory_space<vmem>>, %arg9: memref<32x32xbf16, #tpu.memory_space<vmem>>, %arg10: memref<1x32xf32, #tpu.memory_space<vmem>>, %arg11: memref<32x32xbf16, #tpu.memory_space<vmem>>, %arg12: memref<1x32xf32, #tpu.memory_space<vmem>>, %arg13: memref<32x32xbf16, #tpu.memory_space<vmem>>, %arg14: memref<1x32xf32, #tpu.memory_space<vmem>>, %arg15: memref<32x32xbf16, #tpu.memory_space<vmem>>, %arg16: memref<1x32xf32, #tpu.memory_space<vmem>>, %arg17: memref<32x64xbf16, #tpu.memory_space<vmem>>, %arg18: memref<1x64xf32, #tpu.memory_space<vmem>>, %arg19: memref<64x32xbf16, #tpu.memory_space<vmem>>, %arg20: memref<1x32xf32, #tpu.memory_space<vmem>>, %arg21: memref<1x8x32xf32, #tpu.memory_space<vmem>>, %arg22: memref<8x32xbf16, #tpu.memory_space<vmem>>, %arg23: memref<8x32xbf16, #tpu.memory_space<vmem>>, %arg24: memref<8x32xf32, #tpu.memory_space<vmem>>) attributes {dimension_semantics = [#tpu.dimension_semantics<parallel>, #tpu.dimension_semantics<arbitrary>], iteration_bounds = array<i64: 2, 1>, scalar_prefetch = 0 : i64, scratch_operands = 3 : i64, tpu.core_type = #tpu.core_type<tc>, window_params = [{transform_indices = @transform_0, window_bounds = array<i64: 1, 8, 32>}, {transform_indices = @transform_1, window_bounds = array<i64: 1, 8, 32>}, {transform_indices = @transform_2, window_bounds = array<i64: 1, 1, 8>}, {pipeline_mode = #tpu.pipeline_mode<synchronous>, transform_indices = @transform_3, window_bounds = array<i64: 1, 32>}, {pipeline_mode = #tpu.pipeline_mode<synchronous>, transform_indices = @transform_4, window_bounds = array<i64: 1, 32>}, {pipeline_mode = #tpu.pipeline_mode<synchronous>, transform_indices = @transform_5, window_bounds = array<i64: 1, 32>}, {pipeline_mode = #tpu.pipeline_mode<synchronous>, transform_indices = @transform_6, window_bounds = array<i64: 1, 32>}, {pipeline_mode = #tpu.pipeline_mode<synchronous>, transform_indices = @transform_7, window_bounds = array<i64: 32, 32>}, {pipeline_mode = #tpu.pipeline_mode<synchronous>, transform_indices = @transform_8, window_bounds = array<i64: 1, 32>}, {pipeline_mode = #tpu.pipeline_mode<synchronous>, transform_indices = @transform_9, window_bounds = array<i64: 32, 32>}, {pipeline_mode = #tpu.pipeline_mode<synchronous>, transform_indices = @transform_10, window_bounds = array<i64: 1, 32>}, {pipeline_mode = #tpu.pipeline_mode<synchronous>, transform_indices = @transform_11, window_bounds = array<i64: 32, 32>}, {pipeline_mode = #tpu.pipeline_mode<synchronous>, transform_indices = @transform_12, window_bounds = array<i64: 1, 32>}, {pipeline_mode = #tpu.pipeline_mode<synchronous>, transform_indices = @transform_13, window_bounds = array<i64: 32, 32>}, {pipeline_mode = #tpu.pipeline_mode<synchronous>, transform_indices = @transform_14, window_bounds = array<i64: 1, 32>}, {pipeline_mode = #tpu.pipeline_mode<synchronous>, transform_indices = @transform_15, window_bounds = array<i64: 32, 64>}, {pipeline_mode = #tpu.pipeline_mode<synchronous>, transform_indices = @transform_16, window_bounds = array<i64: 1, 64>}, {pipeline_mode = #tpu.pipeline_mode<synchronous>, transform_indices = @transform_17, window_bounds = array<i64: 64, 32>}, {pipeline_mode = #tpu.pipeline_mode<synchronous>, transform_indices = @transform_18, window_bounds = array<i64: 1, 32>}, {transform_indices = @transform_19, window_bounds = array<i64: 1, 8, 32>}]} {
    %c0_i32 = arith.constant 0 : i32
    %0 = arith.cmpi eq, %arg1, %c0_i32 : i32
    %1 = arith.extui %0 : i1 to i32
    %c0_i32_0 = arith.constant 0 : i32
    %2 = arith.cmpi ne, %1, %c0_i32_0 : i32
    scf.if %2 {
      %c0_90 = arith.constant 0 : index
      %c0_91 = arith.constant 0 : index
      %c0_92 = arith.constant 0 : index
      %173 = vector.load %arg2[%c0_90, %c0_91, %c0_92] : memref<1x8x32xf32, #tpu.memory_space<vmem>>, vector<1x8x32xf32>
      %174 = vector.shape_cast %173 : vector<1x8x32xf32> to vector<8x32xf32>
      %cst_93 = arith.constant dense<0.000000e+00> : vector<8xf32>
      %175 = vector.multi_reduction <add>, %174, %cst_93 [1] : vector<8x32xf32> to vector<8xf32>
      %176 = vector.shape_cast %175 : vector<8xf32> to vector<8x1xf32>
      %cst_94 = arith.constant 3.200000e+01 : f32
      %177 = vector.broadcast %cst_94 : f32 to vector<8x1xf32>
      %178 = arith.divf %176, %177 : vector<8x1xf32>
      %179 = vector.broadcast %178 : vector<8x1xf32> to vector<8x32xf32>
      %180 = arith.subf %174, %179 : vector<8x32xf32>
      %181 = arith.mulf %180, %180 : vector<8x32xf32>
      %cst_95 = arith.constant dense<0.000000e+00> : vector<8xf32>
      %182 = vector.multi_reduction <add>, %181, %cst_95 [1] : vector<8x32xf32> to vector<8xf32>
      %183 = vector.shape_cast %182 : vector<8xf32> to vector<8x1xf32>
      %cst_96 = arith.constant 3.100000e+01 : f32
      %184 = vector.broadcast %cst_96 : f32 to vector<8x1xf32>
      %185 = arith.divf %183, %184 : vector<8x1xf32>
      %186 = math.sqrt %185 : vector<8x1xf32>
      %cst_97 = arith.constant 9.99999997E-7 : f32
      %187 = vector.broadcast %cst_97 : f32 to vector<8x1xf32>
      %188 = arith.addf %186, %187 : vector<8x1xf32>
      %189 = tpu.reciprocal %188 {approx = true} : vector<8x1xf32> -> vector<8x1xf32>
      %c0_98 = arith.constant 0 : index
      %c0_99 = arith.constant 0 : index
      %190 = vector.load %arg5[%c0_98, %c0_99] : memref<1x32xf32, #tpu.memory_space<vmem>>, vector<1x32xf32>
      %191 = vector.broadcast %178 : vector<8x1xf32> to vector<8x32xf32>
      %192 = arith.subf %174, %191 : vector<8x32xf32>
      %193 = vector.broadcast %190 : vector<1x32xf32> to vector<8x32xf32>
      %194 = arith.mulf %193, %192 : vector<8x32xf32>
      %195 = vector.broadcast %189 : vector<8x1xf32> to vector<8x32xf32>
      %196 = arith.mulf %194, %195 : vector<8x32xf32>
      %c0_100 = arith.constant 0 : index
      %c0_101 = arith.constant 0 : index
      %197 = vector.load %arg6[%c0_100, %c0_101] : memref<1x32xf32, #tpu.memory_space<vmem>>, vector<1x32xf32>
      %198 = vector.broadcast %197 : vector<1x32xf32> to vector<8x32xf32>
      %199 = arith.addf %196, %198 : vector<8x32xf32>
      %200 = arith.truncf %199 : vector<8x32xf32> to vector<8x32xbf16>
      %c0_102 = arith.constant 0 : index
      %c0_103 = arith.constant 0 : index
      %201 = vector.load %arg11[%c0_102, %c0_103] : memref<32x32xbf16, #tpu.memory_space<vmem>>, vector<32x32xbf16>
      %cst_104 = arith.constant dense<0.000000e+00> : vector<8x32xf32>
      %202 = tpu.matmul %200, %201, %cst_104 {dimension_numbers = #tpu.dot_dimension_numbers<[1], [0], [0], [1], [0, 0, 1, 1], [], []>} : vector<8x32xbf16>, vector<32x32xbf16>, vector<8x32xf32> -> vector<8x32xf32>
      %c0_105 = arith.constant 0 : index
      %c0_106 = arith.constant 0 : index
      %203 = vector.load %arg12[%c0_105, %c0_106] : memref<1x32xf32, #tpu.memory_space<vmem>>, vector<1x32xf32>
      %204 = vector.broadcast %203 : vector<1x32xf32> to vector<8x32xf32>
      %205 = arith.addf %202, %204 : vector<8x32xf32>
      %206 = arith.truncf %205 : vector<8x32xf32> to vector<8x32xbf16>
      %c0_107 = arith.constant 0 : index
      %c0_108 = arith.constant 0 : index
      %207 = vector.load %arg22[%c0_107, %c0_108] : memref<8x32xbf16, #tpu.memory_space<vmem>>, vector<8x32xbf16>
      tpu.vector_store %arg22[%c0_107, %c0_108], %206 {strides = array<i32>} : memref<8x32xbf16, #tpu.memory_space<vmem>>, vector<8x32xbf16>,
      %c0_109 = arith.constant 0 : index
      %c0_110 = arith.constant 0 : index
      %208 = vector.load %arg13[%c0_109, %c0_110] : memref<32x32xbf16, #tpu.memory_space<vmem>>, vector<32x32xbf16>
      %cst_111 = arith.constant dense<0.000000e+00> : vector<8x32xf32>
      %209 = tpu.matmul %200, %208, %cst_111 {dimension_numbers = #tpu.dot_dimension_numbers<[1], [0], [0], [1], [0, 0, 1, 1], [], []>} : vector<8x32xbf16>, vector<32x32xbf16>, vector<8x32xf32> -> vector<8x32xf32>
      %c0_112 = arith.constant 0 : index
      %c0_113 = arith.constant 0 : index
      %210 = vector.load %arg14[%c0_112, %c0_113] : memref<1x32xf32, #tpu.memory_space<vmem>>, vector<1x32xf32>
      %211 = vector.broadcast %210 : vector<1x32xf32> to vector<8x32xf32>
      %212 = arith.addf %209, %211 : vector<8x32xf32>
      %213 = arith.truncf %212 : vector<8x32xf32> to vector<8x32xbf16>
      %c0_114 = arith.constant 0 : index
      %c0_115 = arith.constant 0 : index
      %214 = vector.load %arg23[%c0_114, %c0_115] : memref<8x32xbf16, #tpu.memory_space<vmem>>, vector<8x32xbf16>
      tpu.vector_store %arg23[%c0_114, %c0_115], %213 {strides = array<i32>} : memref<8x32xbf16, #tpu.memory_space<vmem>>, vector<8x32xbf16>,
    } else {
    }
    %c0 = arith.constant 0 : index
    %c0_1 = arith.constant 0 : index
    %c0_2 = arith.constant 0 : index
    %3 = vector.load %arg3[%c0, %c0_1, %c0_2] : memref<1x8x32xf32, #tpu.memory_space<vmem>>, vector<1x8x32xf32>
    %4 = vector.shape_cast %3 : vector<1x8x32xf32> to vector<8x32xf32>
    %cst = arith.constant dense<0.000000e+00> : vector<8xf32>
    %5 = vector.multi_reduction <add>, %4, %cst [1] : vector<8x32xf32> to vector<8xf32>
    %6 = vector.shape_cast %5 : vector<8xf32> to vector<8x1xf32>
    %cst_3 = arith.constant 3.200000e+01 : f32
    %7 = vector.broadcast %cst_3 : f32 to vector<8x1xf32>
    %8 = arith.divf %6, %7 : vector<8x1xf32>
    %9 = vector.broadcast %8 : vector<8x1xf32> to vector<8x32xf32>
    %10 = arith.subf %4, %9 : vector<8x32xf32>
    %11 = arith.mulf %10, %10 : vector<8x32xf32>
    %cst_4 = arith.constant dense<0.000000e+00> : vector<8xf32>
    %12 = vector.multi_reduction <add>, %11, %cst_4 [1] : vector<8x32xf32> to vector<8xf32>
    %13 = vector.shape_cast %12 : vector<8xf32> to vector<8x1xf32>
    %cst_5 = arith.constant 3.100000e+01 : f32
    %14 = vector.broadcast %cst_5 : f32 to vector<8x1xf32>
    %15 = arith.divf %13, %14 : vector<8x1xf32>
    %16 = math.sqrt %15 : vector<8x1xf32>
    %cst_6 = arith.constant 9.99999997E-7 : f32
    %17 = vector.broadcast %cst_6 : f32 to vector<8x1xf32>
    %18 = arith.addf %16, %17 : vector<8x1xf32>
    %19 = tpu.reciprocal %18 {approx = true} : vector<8x1xf32> -> vector<8x1xf32>
    %c0_7 = arith.constant 0 : index
    %c0_8 = arith.constant 0 : index
    %20 = vector.load %arg5[%c0_7, %c0_8] : memref<1x32xf32, #tpu.memory_space<vmem>>, vector<1x32xf32>
    %21 = vector.broadcast %8 : vector<8x1xf32> to vector<8x32xf32>
    %22 = arith.subf %4, %21 : vector<8x32xf32>
    %23 = vector.broadcast %20 : vector<1x32xf32> to vector<8x32xf32>
    %24 = arith.mulf %23, %22 : vector<8x32xf32>
    %25 = vector.broadcast %19 : vector<8x1xf32> to vector<8x32xf32>
    %26 = arith.mulf %24, %25 : vector<8x32xf32>
    %c0_9 = arith.constant 0 : index
    %c0_10 = arith.constant 0 : index
    %27 = vector.load %arg6[%c0_9, %c0_10] : memref<1x32xf32, #tpu.memory_space<vmem>>, vector<1x32xf32>
    %28 = vector.broadcast %27 : vector<1x32xf32> to vector<8x32xf32>
    %29 = arith.addf %26, %28 : vector<8x32xf32>
    %30 = arith.truncf %29 : vector<8x32xf32> to vector<8x32xbf16>
    %c0_11 = arith.constant 0 : index
    %c0_12 = arith.constant 0 : index
    %31 = vector.load %arg9[%c0_11, %c0_12] : memref<32x32xbf16, #tpu.memory_space<vmem>>, vector<32x32xbf16>
    %cst_13 = arith.constant dense<0.000000e+00> : vector<8x32xf32>
    %32 = tpu.matmul %30, %31, %cst_13 {dimension_numbers = #tpu.dot_dimension_numbers<[1], [0], [0], [1], [0, 0, 1, 1], [], []>} : vector<8x32xbf16>, vector<32x32xbf16>, vector<8x32xf32> -> vector<8x32xf32>
    %c0_14 = arith.constant 0 : index
    %c0_15 = arith.constant 0 : index
    %33 = vector.load %arg10[%c0_14, %c0_15] : memref<1x32xf32, #tpu.memory_space<vmem>>, vector<1x32xf32>
    %34 = vector.broadcast %33 : vector<1x32xf32> to vector<8x32xf32>
    %35 = arith.addf %32, %34 : vector<8x32xf32>
    %cst_16 = arith.constant 0.353553385 : f32
    %36 = vector.broadcast %cst_16 : f32 to vector<8x32xf32>
    %37 = arith.mulf %35, %36 : vector<8x32xf32>
    %38 = arith.truncf %37 : vector<8x32xf32> to vector<8x32xbf16>
    %c0_17 = arith.constant 0 : index
    %c0_18 = arith.constant 0 : index
    %c0_19 = arith.constant 0 : index
    %39 = vector.load %arg4[%c0_17, %c0_18, %c0_19] : memref<1x1x8xf32, #tpu.memory_space<vmem>>, vector<1x1x8xf32>
    %40 = vector.shape_cast %39 : vector<1x1x8xf32> to vector<1x8xf32>
    %cst_20 = arith.constant 0.000000e+00 : f32
    %41 = vector.broadcast %cst_20 : f32 to vector<1x8xf32>
    %42 = arith.cmpf oeq, %40, %41 : vector<1x8xf32>
    %cst_21 = arith.constant -1.000000e+09 : f32
    %cst_22 = arith.constant 0.000000e+00 : f32
    %43 = vector.broadcast %cst_21 : f32 to vector<1x8xf32>
    %44 = vector.broadcast %cst_22 : f32 to vector<1x8xf32>
    %45 = arith.select %42, %43, %44 : vector<1x8xi1>, vector<1x8xf32>
    %46 = vector.extract_strided_slice %38 {offsets = [0, 0], sizes = [8, 8], strides = [1, 1]} : vector<8x32xbf16> to vector<8x8xbf16>
    %c0_23 = arith.constant 0 : index
    %c0_24 = arith.constant 0 : index
    %47 = vector.load %arg22[%c0_23, %c0_24] : memref<8x32xbf16, #tpu.memory_space<vmem>>, vector<8x8xbf16>
    %cst_25 = arith.constant dense<0.000000e+00> : vector<8x8xf32>
    %48 = tpu.matmul %46, %47, %cst_25 {dimension_numbers = #tpu.dot_dimension_numbers<[1], [1], [0], [0], [0, 0, 1, 0], [], []>} : vector<8x8xbf16>, vector<8x8xbf16>, vector<8x8xf32> -> vector<8x8xf32>
    %49 = vector.broadcast %45 : vector<1x8xf32> to vector<8x8xf32>
    %50 = arith.addf %48, %49 : vector<8x8xf32>
    %cst_26 = arith.constant dense<0xFF800000> : vector<8xf32>
    %51 = vector.multi_reduction <maximumf>, %50, %cst_26 [1] : vector<8x8xf32> to vector<8xf32>
    %52 = vector.shape_cast %51 : vector<8xf32> to vector<8x1xf32>
    %53 = vector.broadcast %52 : vector<8x1xf32> to vector<8x8xf32>
    %54 = arith.subf %50, %53 : vector<8x8xf32>
    %55 = math.exp %54 : vector<8x8xf32>
    %cst_27 = arith.constant dense<0.000000e+00> : vector<8xf32>
    %56 = vector.multi_reduction <add>, %55, %cst_27 [1] : vector<8x8xf32> to vector<8xf32>
    %57 = vector.shape_cast %56 : vector<8xf32> to vector<8x1xf32>
    %58 = tpu.reciprocal %57 {approx = true} : vector<8x1xf32> -> vector<8x1xf32>
    %59 = vector.broadcast %58 : vector<8x1xf32> to vector<8x8xf32>
    %60 = arith.mulf %55, %59 : vector<8x8xf32>
    %61 = arith.truncf %60 : vector<8x8xf32> to vector<8x8xbf16>
    %c0_28 = arith.constant 0 : index
    %c0_29 = arith.constant 0 : index
    %62 = vector.load %arg23[%c0_28, %c0_29] : memref<8x32xbf16, #tpu.memory_space<vmem>>, vector<8x8xbf16>
    %cst_30 = arith.constant dense<0.000000e+00> : vector<8x8xf32>
    %63 = tpu.matmul %61, %62, %cst_30 {dimension_numbers = #tpu.dot_dimension_numbers<[1], [0], [0], [1], [0, 0, 1, 1], [], []>} : vector<8x8xbf16>, vector<8x8xbf16>, vector<8x8xf32> -> vector<8x8xf32>
    %c0_31 = arith.constant 0 : index
    %c0_32 = arith.constant 0 : index
    %64 = vector.load %arg24[%c0_31, %c0_32] : memref<8x32xf32, #tpu.memory_space<vmem>>, vector<8x8xf32>
    tpu.vector_store %arg24[%c0_31, %c0_32], %63 {strides = array<i32>} : memref<8x32xf32, #tpu.memory_space<vmem>>, vector<8x8xf32>,
    %65 = vector.extract_strided_slice %38 {offsets = [0, 8], sizes = [8, 8], strides = [1, 1]} : vector<8x32xbf16> to vector<8x8xbf16>
    %c0_33 = arith.constant 0 : index
    %c8 = arith.constant 8 : index
    %66 = vector.load %arg22[%c0_33, %c8] : memref<8x32xbf16, #tpu.memory_space<vmem>>, vector<8x8xbf16>
    %cst_34 = arith.constant dense<0.000000e+00> : vector<8x8xf32>
    %67 = tpu.matmul %65, %66, %cst_34 {dimension_numbers = #tpu.dot_dimension_numbers<[1], [1], [0], [0], [0, 0, 1, 0], [], []>} : vector<8x8xbf16>, vector<8x8xbf16>, vector<8x8xf32> -> vector<8x8xf32>
    %68 = vector.broadcast %45 : vector<1x8xf32> to vector<8x8xf32>
    %69 = arith.addf %67, %68 : vector<8x8xf32>
    %cst_35 = arith.constant dense<0xFF800000> : vector<8xf32>
    %70 = vector.multi_reduction <maximumf>, %69, %cst_35 [1] : vector<8x8xf32> to vector<8xf32>
    %71 = vector.shape_cast %70 : vector<8xf32> to vector<8x1xf32>
    %72 = vector.broadcast %71 : vector<8x1xf32> to vector<8x8xf32>
    %73 = arith.subf %69, %72 : vector<8x8xf32>
    %74 = math.exp %73 : vector<8x8xf32>
    %cst_36 = arith.constant dense<0.000000e+00> : vector<8xf32>
    %75 = vector.multi_reduction <add>, %74, %cst_36 [1] : vector<8x8xf32> to vector<8xf32>
    %76 = vector.shape_cast %75 : vector<8xf32> to vector<8x1xf32>
    %77 = tpu.reciprocal %76 {approx = true} : vector<8x1xf32> -> vector<8x1xf32>
    %78 = vector.broadcast %77 : vector<8x1xf32> to vector<8x8xf32>
    %79 = arith.mulf %74, %78 : vector<8x8xf32>
    %80 = arith.truncf %79 : vector<8x8xf32> to vector<8x8xbf16>
    %c0_37 = arith.constant 0 : index
    %c8_38 = arith.constant 8 : index
    %81 = vector.load %arg23[%c0_37, %c8_38] : memref<8x32xbf16, #tpu.memory_space<vmem>>, vector<8x8xbf16>
    %cst_39 = arith.constant dense<0.000000e+00> : vector<8x8xf32>
    %82 = tpu.matmul %80, %81, %cst_39 {dimension_numbers = #tpu.dot_dimension_numbers<[1], [0], [0], [1], [0, 0, 1, 1], [], []>} : vector<8x8xbf16>, vector<8x8xbf16>, vector<8x8xf32> -> vector<8x8xf32>
    %c0_40 = arith.constant 0 : index
    %c8_41 = arith.constant 8 : index
    %83 = vector.load %arg24[%c0_40, %c8_41] : memref<8x32xf32, #tpu.memory_space<vmem>>, vector<8x8xf32>
    tpu.vector_store %arg24[%c0_40, %c8_41], %82 {strides = array<i32>} : memref<8x32xf32, #tpu.memory_space<vmem>>, vector<8x8xf32>,
    %84 = vector.extract_strided_slice %38 {offsets = [0, 16], sizes = [8, 8], strides = [1, 1]} : vector<8x32xbf16> to vector<8x8xbf16>
    %c0_42 = arith.constant 0 : index
    %c16 = arith.constant 16 : index
    %85 = vector.load %arg22[%c0_42, %c16] : memref<8x32xbf16, #tpu.memory_space<vmem>>, vector<8x8xbf16>
    %cst_43 = arith.constant dense<0.000000e+00> : vector<8x8xf32>
    %86 = tpu.matmul %84, %85, %cst_43 {dimension_numbers = #tpu.dot_dimension_numbers<[1], [1], [0], [0], [0, 0, 1, 0], [], []>} : vector<8x8xbf16>, vector<8x8xbf16>, vector<8x8xf32> -> vector<8x8xf32>
    %87 = vector.broadcast %45 : vector<1x8xf32> to vector<8x8xf32>
    %88 = arith.addf %86, %87 : vector<8x8xf32>
    %cst_44 = arith.constant dense<0xFF800000> : vector<8xf32>
    %89 = vector.multi_reduction <maximumf>, %88, %cst_44 [1] : vector<8x8xf32> to vector<8xf32>
    %90 = vector.shape_cast %89 : vector<8xf32> to vector<8x1xf32>
    %91 = vector.broadcast %90 : vector<8x1xf32> to vector<8x8xf32>
    %92 = arith.subf %88, %91 : vector<8x8xf32>
    %93 = math.exp %92 : vector<8x8xf32>
    %cst_45 = arith.constant dense<0.000000e+00> : vector<8xf32>
    %94 = vector.multi_reduction <add>, %93, %cst_45 [1] : vector<8x8xf32> to vector<8xf32>
    %95 = vector.shape_cast %94 : vector<8xf32> to vector<8x1xf32>
    %96 = tpu.reciprocal %95 {approx = true} : vector<8x1xf32> -> vector<8x1xf32>
    %97 = vector.broadcast %96 : vector<8x1xf32> to vector<8x8xf32>
    %98 = arith.mulf %93, %97 : vector<8x8xf32>
    %99 = arith.truncf %98 : vector<8x8xf32> to vector<8x8xbf16>
    %c0_46 = arith.constant 0 : index
    %c16_47 = arith.constant 16 : index
    %100 = vector.load %arg23[%c0_46, %c16_47] : memref<8x32xbf16, #tpu.memory_space<vmem>>, vector<8x8xbf16>
    %cst_48 = arith.constant dense<0.000000e+00> : vector<8x8xf32>
    %101 = tpu.matmul %99, %100, %cst_48 {dimension_numbers = #tpu.dot_dimension_numbers<[1], [0], [0], [1], [0, 0, 1, 1], [], []>} : vector<8x8xbf16>, vector<8x8xbf16>, vector<8x8xf32> -> vector<8x8xf32>
    %c0_49 = arith.constant 0 : index
    %c16_50 = arith.constant 16 : index
    %102 = vector.load %arg24[%c0_49, %c16_50] : memref<8x32xf32, #tpu.memory_space<vmem>>, vector<8x8xf32>
    tpu.vector_store %arg24[%c0_49, %c16_50], %101 {strides = array<i32>} : memref<8x32xf32, #tpu.memory_space<vmem>>, vector<8x8xf32>,
    %103 = vector.extract_strided_slice %38 {offsets = [0, 24], sizes = [8, 8], strides = [1, 1]} : vector<8x32xbf16> to vector<8x8xbf16>
    %c0_51 = arith.constant 0 : index
    %c24 = arith.constant 24 : index
    %104 = vector.load %arg22[%c0_51, %c24] : memref<8x32xbf16, #tpu.memory_space<vmem>>, vector<8x8xbf16>
    %cst_52 = arith.constant dense<0.000000e+00> : vector<8x8xf32>
    %105 = tpu.matmul %103, %104, %cst_52 {dimension_numbers = #tpu.dot_dimension_numbers<[1], [1], [0], [0], [0, 0, 1, 0], [], []>} : vector<8x8xbf16>, vector<8x8xbf16>, vector<8x8xf32> -> vector<8x8xf32>
    %106 = vector.broadcast %45 : vector<1x8xf32> to vector<8x8xf32>
    %107 = arith.addf %105, %106 : vector<8x8xf32>
    %cst_53 = arith.constant dense<0xFF800000> : vector<8xf32>
    %108 = vector.multi_reduction <maximumf>, %107, %cst_53 [1] : vector<8x8xf32> to vector<8xf32>
    %109 = vector.shape_cast %108 : vector<8xf32> to vector<8x1xf32>
    %110 = vector.broadcast %109 : vector<8x1xf32> to vector<8x8xf32>
    %111 = arith.subf %107, %110 : vector<8x8xf32>
    %112 = math.exp %111 : vector<8x8xf32>
    %cst_54 = arith.constant dense<0.000000e+00> : vector<8xf32>
    %113 = vector.multi_reduction <add>, %112, %cst_54 [1] : vector<8x8xf32> to vector<8xf32>
    %114 = vector.shape_cast %113 : vector<8xf32> to vector<8x1xf32>
    %115 = tpu.reciprocal %114 {approx = true} : vector<8x1xf32> -> vector<8x1xf32>
    %116 = vector.broadcast %115 : vector<8x1xf32> to vector<8x8xf32>
    %117 = arith.mulf %112, %116 : vector<8x8xf32>
    %118 = arith.truncf %117 : vector<8x8xf32> to vector<8x8xbf16>
    %c0_55 = arith.constant 0 : index
    %c24_56 = arith.constant 24 : index
    %119 = vector.load %arg23[%c0_55, %c24_56] : memref<8x32xbf16, #tpu.memory_space<vmem>>, vector<8x8xbf16>
    %cst_57 = arith.constant dense<0.000000e+00> : vector<8x8xf32>
    %120 = tpu.matmul %118, %119, %cst_57 {dimension_numbers = #tpu.dot_dimension_numbers<[1], [0], [0], [1], [0, 0, 1, 1], [], []>} : vector<8x8xbf16>, vector<8x8xbf16>, vector<8x8xf32> -> vector<8x8xf32>
    %c0_58 = arith.constant 0 : index
    %c24_59 = arith.constant 24 : index
    %121 = vector.load %arg24[%c0_58, %c24_59] : memref<8x32xf32, #tpu.memory_space<vmem>>, vector<8x8xf32>
    tpu.vector_store %arg24[%c0_58, %c24_59], %120 {strides = array<i32>} : memref<8x32xf32, #tpu.memory_space<vmem>>, vector<8x8xf32>,
    %c0_60 = arith.constant 0 : index
    %c0_61 = arith.constant 0 : index
    %122 = vector.load %arg24[%c0_60, %c0_61] : memref<8x32xf32, #tpu.memory_space<vmem>>, vector<8x32xf32>
    %123 = arith.truncf %122 : vector<8x32xf32> to vector<8x32xbf16>
    %c0_62 = arith.constant 0 : index
    %c0_63 = arith.constant 0 : index
    %124 = vector.load %arg15[%c0_62, %c0_63] : memref<32x32xbf16, #tpu.memory_space<vmem>>, vector<32x32xbf16>
    %cst_64 = arith.constant dense<0.000000e+00> : vector<8x32xf32>
    %125 = tpu.matmul %123, %124, %cst_64 {dimension_numbers = #tpu.dot_dimension_numbers<[1], [0], [0], [1], [0, 0, 1, 1], [], []>} : vector<8x32xbf16>, vector<32x32xbf16>, vector<8x32xf32> -> vector<8x32xf32>
    %c0_65 = arith.constant 0 : index
    %c0_66 = arith.constant 0 : index
    %126 = vector.load %arg16[%c0_65, %c0_66] : memref<1x32xf32, #tpu.memory_space<vmem>>, vector<1x32xf32>
    %127 = vector.broadcast %126 : vector<1x32xf32> to vector<8x32xf32>
    %128 = arith.addf %125, %127 : vector<8x32xf32>
    %129 = arith.addf %4, %128 : vector<8x32xf32>
    %cst_67 = arith.constant dense<0.000000e+00> : vector<8xf32>
    %130 = vector.multi_reduction <add>, %129, %cst_67 [1] : vector<8x32xf32> to vector<8xf32>
    %131 = vector.shape_cast %130 : vector<8xf32> to vector<8x1xf32>
    %cst_68 = arith.constant 3.200000e+01 : f32
    %132 = vector.broadcast %cst_68 : f32 to vector<8x1xf32>
    %133 = arith.divf %131, %132 : vector<8x1xf32>
    %134 = vector.broadcast %133 : vector<8x1xf32> to vector<8x32xf32>
    %135 = arith.subf %129, %134 : vector<8x32xf32>
    %136 = arith.mulf %135, %135 : vector<8x32xf32>
    %cst_69 = arith.constant dense<0.000000e+00> : vector<8xf32>
    %137 = vector.multi_reduction <add>, %136, %cst_69 [1] : vector<8x32xf32> to vector<8xf32>
    %138 = vector.shape_cast %137 : vector<8xf32> to vector<8x1xf32>
    %cst_70 = arith.constant 3.100000e+01 : f32
    %139 = vector.broadcast %cst_70 : f32 to vector<8x1xf32>
    %140 = arith.divf %138, %139 : vector<8x1xf32>
    %141 = math.sqrt %140 : vector<8x1xf32>
    %cst_71 = arith.constant 9.99999997E-7 : f32
    %142 = vector.broadcast %cst_71 : f32 to vector<8x1xf32>
    %143 = arith.addf %141, %142 : vector<8x1xf32>
    %144 = tpu.reciprocal %143 {approx = true} : vector<8x1xf32> -> vector<8x1xf32>
    %c0_72 = arith.constant 0 : index
    %c0_73 = arith.constant 0 : index
    %145 = vector.load %arg7[%c0_72, %c0_73] : memref<1x32xf32, #tpu.memory_space<vmem>>, vector<1x32xf32>
    %146 = vector.broadcast %133 : vector<8x1xf32> to vector<8x32xf32>
    %147 = arith.subf %129, %146 : vector<8x32xf32>
    %148 = vector.broadcast %145 : vector<1x32xf32> to vector<8x32xf32>
    %149 = arith.mulf %148, %147 : vector<8x32xf32>
    %150 = vector.broadcast %144 : vector<8x1xf32> to vector<8x32xf32>
    %151 = arith.mulf %149, %150 : vector<8x32xf32>
    %c0_74 = arith.constant 0 : index
    %c0_75 = arith.constant 0 : index
    %152 = vector.load %arg8[%c0_74, %c0_75] : memref<1x32xf32, #tpu.memory_space<vmem>>, vector<1x32xf32>
    %153 = vector.broadcast %152 : vector<1x32xf32> to vector<8x32xf32>
    %154 = arith.addf %151, %153 : vector<8x32xf32>
    %155 = arith.truncf %154 : vector<8x32xf32> to vector<8x32xbf16>
    %c0_76 = arith.constant 0 : index
    %c0_77 = arith.constant 0 : index
    %156 = vector.load %arg17[%c0_76, %c0_77] : memref<32x64xbf16, #tpu.memory_space<vmem>>, vector<32x64xbf16>
    %cst_78 = arith.constant dense<0.000000e+00> : vector<8x64xf32>
    %157 = tpu.matmul %155, %156, %cst_78 {dimension_numbers = #tpu.dot_dimension_numbers<[1], [0], [0], [1], [0, 0, 1, 1], [], []>} : vector<8x32xbf16>, vector<32x64xbf16>, vector<8x64xf32> -> vector<8x64xf32>
    %c0_79 = arith.constant 0 : index
    %c0_80 = arith.constant 0 : index
    %158 = vector.load %arg18[%c0_79, %c0_80] : memref<1x64xf32, #tpu.memory_space<vmem>>, vector<1x64xf32>
    %159 = vector.broadcast %158 : vector<1x64xf32> to vector<8x64xf32>
    %160 = arith.addf %157, %159 : vector<8x64xf32>
    %cst_81 = arith.constant 0.000000e+00 : f32
    %161 = vector.broadcast %cst_81 : f32 to vector<8x64xf32>
    %162 = arith.maximumf %160, %161 : vector<8x64xf32>
    %163 = arith.truncf %162 : vector<8x64xf32> to vector<8x64xbf16>
    %c0_82 = arith.constant 0 : index
    %c0_83 = arith.constant 0 : index
    %164 = vector.load %arg19[%c0_82, %c0_83] : memref<64x32xbf16, #tpu.memory_space<vmem>>, vector<64x32xbf16>
    %cst_84 = arith.constant dense<0.000000e+00> : vector<8x32xf32>
    %165 = tpu.matmul %163, %164, %cst_84 {dimension_numbers = #tpu.dot_dimension_numbers<[1], [0], [0], [1], [0, 0, 1, 1], [], []>} : vector<8x64xbf16>, vector<64x32xbf16>, vector<8x32xf32> -> vector<8x32xf32>
    %c0_85 = arith.constant 0 : index
    %c0_86 = arith.constant 0 : index
    %166 = vector.load %arg20[%c0_85, %c0_86] : memref<1x32xf32, #tpu.memory_space<vmem>>, vector<1x32xf32>
    %167 = vector.broadcast %166 : vector<1x32xf32> to vector<8x32xf32>
    %168 = arith.addf %165, %167 : vector<8x32xf32>
    %169 = arith.addf %129, %168 : vector<8x32xf32>
    %c0_87 = arith.constant 0 : index
    %c0_88 = arith.constant 0 : index
    %c0_89 = arith.constant 0 : index
    %170 = vector.load %arg21[%c0_87, %c0_88, %c0_89] : memref<1x8x32xf32, #tpu.memory_space<vmem>>, vector<1x8x32xf32>
    %171 = vector.shape_cast %170 : vector<1x8x32xf32> to vector<8x32xf32>
    %172 = vector.shape_cast %169 : vector<8x32xf32> to vector<1x8x32xf32>
    tpu.vector_store %arg21[%c0_87, %c0_88, %c0_89], %172 {strides = array<i32>} : memref<1x8x32xf32, #tpu.memory_space<vmem>>, vector<1x8x32xf32>,
    return
  }
  func.func @transform_0(%arg0: i32, %arg1: i32) -> (i32, i32, i32) {
    %c0_i32 = arith.constant 0 : i32
    %c0_i32_0 = arith.constant 0 : i32
    %c0_i32_1 = arith.constant 0 : i32
    return %arg0, %c0_i32, %c0_i32_0 : i32, i32, i32
  }
  func.func @transform_1(%arg0: i32, %arg1: i32) -> (i32, i32, i32) {
    %c0_i32 = arith.constant 0 : i32
    %c0_i32_0 = arith.constant 0 : i32
    return %arg0, %arg1, %c0_i32 : i32, i32, i32
  }
  func.func @transform_2(%arg0: i32, %arg1: i32) -> (i32, i32, i32) {
    %c0_i32 = arith.constant 0 : i32
    %c0_i32_0 = arith.constant 0 : i32
    %c0_i32_1 = arith.constant 0 : i32
    return %arg0, %c0_i32, %c0_i32_0 : i32, i32, i32
  }
  func.func @transform_3(%arg0: i32, %arg1: i32) -> (i32, i32) {
    %c0_i32 = arith.constant 0 : i32
    %c0_i32_0 = arith.constant 0 : i32
    %c0_i32_1 = arith.constant 0 : i32
    return %c0_i32, %c0_i32_0 : i32, i32
  }
  func.func @transform_4(%arg0: i32, %arg1: i32) -> (i32, i32) {
    %c0_i32 = arith.constant 0 : i32
    %c0_i32_0 = arith.constant 0 : i32
    %c0_i32_1 = arith.constant 0 : i32
    return %c0_i32, %c0_i32_0 : i32, i32
  }
  func.func @transform_5(%arg0: i32, %arg1: i32) -> (i32, i32) {
    %c0_i32 = arith.constant 0 : i32
    %c0_i32_0 = arith.constant 0 : i32
    %c0_i32_1 = arith.constant 0 : i32
    return %c0_i32, %c0_i32_0 : i32, i32
  }
  func.func @transform_6(%arg0: i32, %arg1: i32) -> (i32, i32) {
    %c0_i32 = arith.constant 0 : i32
    %c0_i32_0 = arith.constant 0 : i32
    %c0_i32_1 = arith.constant 0 : i32
    return %c0_i32, %c0_i32_0 : i32, i32
  }
  func.func @transform_7(%arg0: i32, %arg1: i32) -> (i32, i32) {
    %c0_i32 = arith.constant 0 : i32
    %c0_i32_0 = arith.constant 0 : i32
    %c0_i32_1 = arith.constant 0 : i32
    return %c0_i32, %c0_i32_0 : i32, i32
  }
  func.func @transform_8(%arg0: i32, %arg1: i32) -> (i32, i32) {
    %c0_i32 = arith.constant 0 : i32
    %c0_i32_0 = arith.constant 0 : i32
    %c0_i32_1 = arith.constant 0 : i32
    return %c0_i32, %c0_i32_0 : i32, i32
  }
  func.func @transform_9(%arg0: i32, %arg1: i32) -> (i32, i32) {
    %c0_i32 = arith.constant 0 : i32
    %c0_i32_0 = arith.constant 0 : i32
    %c0_i32_1 = arith.constant 0 : i32
    return %c0_i32, %c0_i32_0 : i32, i32
  }
  func.func @transform_10(%arg0: i32, %arg1: i32) -> (i32, i32) {
    %c0_i32 = arith.constant 0 : i32
    %c0_i32_0 = arith.constant 0 : i32
    %c0_i32_1 = arith.constant 0 : i32
    return %c0_i32, %c0_i32_0 : i32, i32
  }
  func.func @transform_11(%arg0: i32, %arg1: i32) -> (i32, i32) {
    %c0_i32 = arith.constant 0 : i32
    %c0_i32_0 = arith.constant 0 : i32
    %c0_i32_1 = arith.constant 0 : i32
    return %c0_i32, %c0_i32_0 : i32, i32
  }
  func.func @transform_12(%arg0: i32, %arg1: i32) -> (i32, i32) {
    %c0_i32 = arith.constant 0 : i32
    %c0_i32_0 = arith.constant 0 : i32
    %c0_i32_1 = arith.constant 0 : i32
    return %c0_i32, %c0_i32_0 : i32, i32
  }
  func.func @transform_13(%arg0: i32, %arg1: i32) -> (i32, i32) {
    %c0_i32 = arith.constant 0 : i32
    %c0_i32_0 = arith.constant 0 : i32
    %c0_i32_1 = arith.constant 0 : i32
    return %c0_i32, %c0_i32_0 : i32, i32
  }
  func.func @transform_14(%arg0: i32, %arg1: i32) -> (i32, i32) {
    %c0_i32 = arith.constant 0 : i32
    %c0_i32_0 = arith.constant 0 : i32
    %c0_i32_1 = arith.constant 0 : i32
    return %c0_i32, %c0_i32_0 : i32, i32
  }
  func.func @transform_15(%arg0: i32, %arg1: i32) -> (i32, i32) {
    %c0_i32 = arith.constant 0 : i32
    %c0_i32_0 = arith.constant 0 : i32
    %c0_i32_1 = arith.constant 0 : i32
    return %c0_i32, %c0_i32_0 : i32, i32
  }
  func.func @transform_16(%arg0: i32, %arg1: i32) -> (i32, i32) {
    %c0_i32 = arith.constant 0 : i32
    %c0_i32_0 = arith.constant 0 : i32
    %c0_i32_1 = arith.constant 0 : i32
    return %c0_i32, %c0_i32_0 : i32, i32
  }
  func.func @transform_17(%arg0: i32, %arg1: i32) -> (i32, i32) {
    %c0_i32 = arith.constant 0 : i32
    %c0_i32_0 = arith.constant 0 : i32
    %c0_i32_1 = arith.constant 0 : i32
    return %c0_i32, %c0_i32_0 : i32, i32
  }
  func.func @transform_18(%arg0: i32, %arg1: i32) -> (i32, i32) {
    %c0_i32 = arith.constant 0 : i32
    %c0_i32_0 = arith.constant 0 : i32
    %c0_i32_1 = arith.constant 0 : i32
    return %c0_i32, %c0_i32_0 : i32, i32
  }
  func.func @transform_19(%arg0: i32, %arg1: i32) -> (i32, i32, i32) {
    %c0_i32 = arith.constant 0 : i32
    %c0_i32_0 = arith.constant 0 : i32
    return %arg0, %arg1, %c0_i32 : i32, i32, i32
  }
}

</mosaic_0001>

<llo_original>
// kernel: tpu_custom_call.1
$region0: #{tpu_custom_call.1}
  #allocation0 [shape = 'u32[]', space=smem, size = 0x4, offset = 0x4, fixed_abs, tag = 'smem constant byte address 0x4 - core index']
  #allocation1 [shape = 'u32[72,128]{1,0:T(1,128)}', space=vmem, size = 0x9000, scoped, tag = 'internal scratch']
  #allocation2 [shape = 'bf16[8,32]{1,0:T(8,128)(2,1)}', space=vmem, size = 0x800, scoped, tag = 'scratch operand']
  #allocation3 [shape = 'bf16[8,32]{1,0:T(8,128)(2,1)}', space=vmem, size = 0x800, scoped, tag = 'scratch operand']
  #allocation4 [shape = 'f32[8,32]{1,0:T(8,128)}', space=vmem, size = 0x1000, scoped, tag = 'scratch operand']
  %s0 = inlined_call_operand.vmem [shape: f32[2,8,32], index: 0, kind: input, shape index: {}]
  %s1 = inlined_call_operand.vmem [shape: f32[2,8,32], index: 1, kind: input, shape index: {}]
  %s2 = inlined_call_operand.hbm [shape: f32[2,1,8], index: 2, kind: input, shape index: {}]
  %s3 = inlined_call_operand.hbm [shape: f32[1,32], index: 3, kind: input, shape index: {}]
  %s4 = inlined_call_operand.hbm [shape: f32[1,32], index: 4, kind: input, shape index: {}]
  %s5 = inlined_call_operand.hbm [shape: f32[1,32], index: 5, kind: input, shape index: {}]
  %s6 = inlined_call_operand.hbm [shape: f32[1,32], index: 6, kind: input, shape index: {}]
  %s7 = inlined_call_operand.vmem [shape: bf16[32,32], index: 7, kind: input, shape index: {}]
  %s8 = inlined_call_operand.hbm [shape: f32[1,32], index: 8, kind: input, shape index: {}]
  %s9 = inlined_call_operand.hbm [shape: bf16[32,32], index: 9, kind: input, shape index: {}]
  %s10 = inlined_call_operand.hbm [shape: f32[1,32], index: 10, kind: input, shape index: {}]
  %s11 = inlined_call_operand.hbm [shape: bf16[32,32], index: 11, kind: input, shape index: {}]
  %s12 = inlined_call_operand.hbm [shape: f32[1,32], index: 12, kind: input, shape index: {}]
  %s13 = inlined_call_operand.hbm [shape: bf16[32,32], index: 13, kind: input, shape index: {}]
  %s14 = inlined_call_operand.hbm [shape: f32[1,32], index: 14, kind: input, shape index: {}]
  %s15 = inlined_call_operand.hbm [shape: bf16[32,64], index: 15, kind: input, shape index: {}]
  %s16 = inlined_call_operand.hbm [shape: f32[1,64], index: 16, kind: input, shape index: {}]
  %s17 = inlined_call_operand.vmem [shape: bf16[64,32], index: 17, kind: input, shape index: {}]
  %s18 = inlined_call_operand.vmem [shape: f32[1,32], index: 18, kind: input, shape index: {}]
  %s19 = inlined_call_operand.hbm [shape: f32[2,8,32], index: 19, kind: output, shape index: {}]
  %s20 = sld [smem:[#allocation0]]
  $region169: #{tpu_custom_call.1} parent=0
    _
  %s22 = ssub.s32 1, %s20
  %s23 = scalar_select 0, %s22, %s20
  $region1: #{tpu_custom_call.1} parent=0
    #allocation5 [shape = 'u8[1024]{0}', space=vmem, size = 0x400, scoped, tag = 'input window, operand 2']
    #allocation6 [shape = 's32[2]{0}', space=sflag, size = 0x8, scoped, tag = 'scoped memory for tpu_custom_call.1']
    #allocation7 [shape = 's32[2]{0}', space=sflag, size = 0x8, scoped, tag = 'scoped memory for tpu_custom_call.1']
    #allocation8 [shape = 'u8[512]{0}', space=vmem, size = 0x400, scoped, tag = 'input window, operand 3, single buffered']
    #allocation9 [shape = 's32[1]{0}', space=sflag, size = 0x4, scoped, tag = 'scoped memory for tpu_custom_call.1']
    #allocation10 [shape = 'u8[512]{0}', space=vmem, size = 0x400, scoped, tag = 'input window, operand 4, single buffered']
    #allocation11 [shape = 'u8[512]{0}', space=vmem, size = 0x400, scoped, tag = 'input window, operand 5, single buffered']
    #allocation12 [shape = 's32[1]{0}', space=sflag, size = 0x4, scoped, tag = 'scoped memory for tpu_custom_call.1']
    #allocation13 [shape = 'u8[512]{0}', space=vmem, size = 0x400, scoped, tag = 'input window, operand 6, single buffered']
    #allocation14 [shape = 'u8[512]{0}', space=vmem, size = 0x400, scoped, tag = 'input window, operand 8, single buffered']
    #allocation15 [shape = 's32[1]{0}', space=sflag, size = 0x4, scoped, tag = 'scoped memory for tpu_custom_call.1']
    #allocation16 [shape = 'u8[8192]{0}', space=vmem, size = 0x2000, scoped, tag = 'input window, operand 9, single buffered']
    #allocation17 [shape = 'u8[512]{0}', space=vmem, size = 0x400, scoped, tag = 'input window, operand 10, single buffered']
    #allocation18 [shape = 's32[1]{0}', space=sflag, size = 0x4, scoped, tag = 'scoped memory for tpu_custom_call.1']
    #allocation19 [shape = 'u8[8192]{0}', space=vmem, size = 0x2000, scoped, tag = 'input window, operand 11, single buffered']
    #allocation20 [shape = 'u8[512]{0}', space=vmem, size = 0x400, scoped, tag = 'input window, operand 12, single buffered']
    #allocation21 [shape = 's32[1]{0}', space=sflag, size = 0x4, scoped, tag = 'scoped memory for tpu_custom_call.1']
    #allocation22 [shape = 'u8[8192]{0}', space=vmem, size = 0x2000, scoped, tag = 'input window, operand 13, single buffered']
    #allocation23 [shape = 'u8[512]{0}', space=vmem, size = 0x400, scoped, tag = 'input window, operand 14, single buffered']
    #allocation24 [shape = 's32[1]{0}', space=sflag, size = 0x4, scoped, tag = 'scoped memory for tpu_custom_call.1']
    #allocation25 [shape = 'u8[8192]{0}', space=vmem, size = 0x2000, scoped, tag = 'input window, operand 15, single buffered']
    #allocation26 [shape = 'u8[512]{0}', space=vmem, size = 0x400, scoped, tag = 'input window, operand 16, single buffered']
    #allocation27 [shape = 's32[1]{0}', space=sflag, size = 0x4, scoped, tag = 'scoped memory for tpu_custom_call.1']
    #allocation28 [shape = 'u8[8192]{0}', space=vmem, size = 0x2000, scoped, tag = 'output window, operand 0']
    %24 = vsyncpa [#allocation6], 0
    %s25 = scalar_lea.sflag [#allocation6], 1
    %26 = vsyncpa %s25, 0
    %27 = vsyncpa [#allocation9], 0
    %28 = vsyncpa [#allocation12], 0
    %29 = vsyncpa [#allocation15], 0
    %30 = vsyncpa [#allocation18], 0
    %31 = vsyncpa [#allocation21], 0
    %32 = vsyncpa [#allocation24], 0
    %33 = vsyncpa [#allocation27], 0
    %34 = vsyncpa [#allocation7], 0
    %s35 = scalar_lea.sflag [#allocation7], 1
    %36 = vsyncpa %s35, 0
    loop: start=0, step=1, limit=4
    $region2: #{tpu_custom_call.1} parent=1 // loop_pre_header
      _
    $region3: #{tpu_custom_call.1} parent=1 // loop_header
      %s38 = sphi 0, %s42
      %p39 = scmp.ge.s32.totalorder %s38, 4
      %s45 = sphi 0, %s57
      %s46 = sphi 0, %s53
      %s47 = sphi 0, %s45
      %s48 = sphi 0, %s46
      %s49 = sphi 0, %s47
      %s50 = sphi 0, %s48
      %s60 = sphi 0, %s62
      %s63 = sphi 0, %s60
      %s64 = sphi 0, %s63
      %s80 = sphi 0, %s64
      %s88 = sphi 0, %s90
      %s91 = sphi 0, %s88
      %s92 = sphi 0, %s91
      %s108 = sphi 0, %s92
      %s114 = sphi 0, %s116
      %s117 = sphi 0, %s114
      %s118 = sphi 0, %s117
      %s134 = sphi 0, %s118
      %s138 = sphi 0, %s138
      %s140 = sphi 0, %s138
      %s141 = sphi 0, %s140
      %s155 = sphi 0, %s141
      %s159 = sphi 0, %s159
      %s161 = sphi 0, %s159
      %s162 = sphi 0, %s161
      %s176 = sphi 0, %s162
      %s180 = sphi 0, %s180
      %s182 = sphi 0, %s180
      %s183 = sphi 0, %s182
      %s197 = sphi 0, %s183
      %s201 = sphi 0, %s201
      %s203 = sphi 0, %s201
      %s204 = sphi 0, %s203
      %s218 = sphi 0, %s204
      %s222 = sphi 0, %s222
      %s224 = sphi 0, %s222
      %s225 = sphi 0, %s224
      %s239 = sphi 0, %s225
      %s243 = sphi 0, %s243
      %s245 = sphi 0, %s243
      %s246 = sphi 0, %s245
      %s260 = sphi 0, %s246
      %s264 = sphi 0, %s264
      %s266 = sphi 0, %s264
      %s267 = sphi 0, %s266
      %s281 = sphi 0, %s267
      %s285 = sphi 0, %s285
      %s287 = sphi 0, %s285
      %s288 = sphi 0, %s287
      %s302 = sphi 0, %s288
      %s306 = sphi 0, %s306
      %s308 = sphi 0, %s306
      %s309 = sphi 0, %s308
      %s323 = sphi 0, %s309
      %s327 = sphi 0, %s327
      %s329 = sphi 0, %s327
      %s330 = sphi 0, %s329
      %s344 = sphi 0, %s330
      %s348 = sphi 0, %s348
      %s350 = sphi 0, %s348
      %s351 = sphi 0, %s350
      %s365 = sphi 0, %s351
      %s369 = sphi 0, %s369
      %s371 = sphi 0, %s369
      %s372 = sphi 0, %s371
      %s386 = sphi 0, %s372
      %s390 = sphi 0, %s390
      %s392 = sphi 0, %s390
      %s393 = sphi 0, %s392
      %s407 = sphi 0, %s393
      %s411 = sphi 0, %s411
      %s413 = sphi 0, %s411
      %s414 = sphi 0, %s413
      %s428 = sphi 0, %s414
      %s432 = sphi 0, %s432
      %s434 = sphi 0, %s432
      %s435 = sphi 0, %s434
      %s449 = sphi 0, %s435
      %s453 = sphi 0, %s453
      %s455 = sphi 0, %s453
      %s456 = sphi 0, %s455
      %s470 = sphi 0, %s456
      %s478 = sphi 0, %s480
      %s481 = sphi 0, %s478
      %s482 = sphi 0, %s481
      %s498 = sphi 0, %s482
    $region4: #{tpu_custom_call.1} parent=1 // loop_header_branch
      %41 = sbr.rel (%p39) target = $region8
    $region5: #{tpu_custom_call.1} parent=1 // loop_body
      %s43 = ssub.s32 %s38, 1
      %s44 = ssub.s32 %s38, 2
      %s51 = sadd.s32 1, %s46
      %p52 = scmp.ge.s32.totalorder %s51, 1
      %s53 = scalar_select %p52, 0, %s51
      %s54 = sadd.s32 1, %s45
      %s55 = scalar_select %p52, %s54, %s45
      %p56 = scmp.ge.s32.totalorder %s55, 2
      %s57 = scalar_select %p56, 0, %s55
      %s58 = ssub.s32 %s45, %s57
      %p59 = scmp.eq.s32.totalorder %s58, 0
      %s61 = sadd.s32 %s60, 1
      %s62 = scalar_select %p59, %s60, %s61
      %p65 = pneg %p59
      %p66 = scmp.eq.s32.totalorder %s38, 1
      %p67 = por %p65, %p66
      %p68 = scmp.ne.s32.totalorder %s60, %s63
      %p69 = scmp.eq.s32.totalorder %s38, 0
      %p70 = por %p68, %p69
      %p71 = scmp.ne.s32.totalorder %s60, %s63
      %p72 = scmp.eq.s32.totalorder %s43, 1
      %p73 = por %p71, %p72
      %p74 = scmp.ne.s32.totalorder %s63, %s64
      %p75 = scmp.eq.s32.totalorder %s43, 0
      %p76 = por %p74, %p75
      %p77 = scmp.ne.s32.totalorder %s63, %s64
      %p78 = scmp.eq.s32.totalorder %s44, 1
      %p79 = por %p77, %p78
      %p81 = scmp.ne.s32.totalorder %s64, %s80
      %p82 = scmp.eq.s32.totalorder %s44, 0
      %p83 = por %p81, %p82
      %s84 = ssub.s32 %s45, %s57
      %s85 = ssub.s32 %s46, %s53
      %s86 = sor.u32 %s84, %s85
      %p87 = scmp.eq.s32.totalorder %s86, 0
      %s89 = sadd.s32 %s88, 1
      %s90 = scalar_select %p87, %s88, %s89
      %p93 = pneg %p87
      %p94 = scmp.eq.s32.totalorder %s38, 1
      %p95 = por %p93, %p94
      %p96 = scmp.ne.s32.totalorder %s88, %s91
      %p97 = scmp.eq.s32.totalorder %s38, 0
      %p98 = por %p96, %p97
      %p99 = scmp.ne.s32.totalorder %s88, %s91
      %p100 = scmp.eq.s32.totalorder %s43, 1
      %p101 = por %p99, %p100
      %p102 = scmp.ne.s32.totalorder %s91, %s92
      %p103 = scmp.eq.s32.totalorder %s43, 0
      %p104 = por %p102, %p103
      %p105 = scmp.ne.s32.totalorder %s91, %s92
      %p106 = scmp.eq.s32.totalorder %s44, 1
      %p107 = por %p105, %p106
      %p109 = scmp.ne.s32.totalorder %s92, %s108
      %p110 = scmp.eq.s32.totalorder %s44, 0
      %p111 = por %p109, %p110
      %s112 = ssub.s32 %s45, %s57
      %p113 = scmp.eq.s32.totalorder %s112, 0
      %s115 = sadd.s32 %s114, 1
      %s116 = scalar_select %p113, %s114, %s115
      %p119 = pneg %p113
      %p120 = scmp.eq.s32.totalorder %s38, 1
      %p121 = por %p119, %p120
      %p122 = scmp.ne.s32.totalorder %s114, %s117
      %p123 = scmp.eq.s32.totalorder %s38, 0
      %p124 = por %p122, %p123
      %p125 = scmp.ne.s32.totalorder %s114, %s117
      %p126 = scmp.eq.s32.totalorder %s43, 1
      %p127 = por %p125, %p126
      %p128 = scmp.ne.s32.totalorder %s117, %s118
      %p129 = scmp.eq.s32.totalorder %s43, 0
      %p130 = por %p128, %p129
      %p131 = scmp.ne.s32.totalorder %s117, %s118
      %p132 = scmp.eq.s32.totalorder %s44, 1
      %p133 = por %p131, %p132
      %p135 = scmp.ne.s32.totalorder %s118, %s134
      %p136 = scmp.eq.s32.totalorder %s44, 0
      %p137 = por %p135, %p136
      %s139 = sadd.s32 %s138, 1
      %p142 = scmp.eq.s32.totalorder %s38, 1
      %p143 = scmp.ne.s32.totalorder %s138, %s140
      %p144 = scmp.eq.s32.totalorder %s38, 0
      %p145 = por %p143, %p144
      %p146 = scmp.ne.s32.totalorder %s138, %s140
      %p147 = scmp.eq.s32.totalorder %s43, 1
      %p148 = por %p146, %p147
      %p149 = scmp.ne.s32.totalorder %s140, %s141
      %p150 = scmp.eq.s32.totalorder %s43, 0
      %p151 = por %p149, %p150
      %p152 = scmp.ne.s32.totalorder %s140, %s141
      %p153 = scmp.eq.s32.totalorder %s44, 1
      %p154 = por %p152, %p153
      %p156 = scmp.ne.s32.totalorder %s141, %s155
      %p157 = scmp.eq.s32.totalorder %s44, 0
      %p158 = por %p156, %p157
      %s160 = sadd.s32 %s159, 1
      %p163 = scmp.eq.s32.totalorder %s38, 1
      %p164 = scmp.ne.s32.totalorder %s159, %s161
      %p165 = scmp.eq.s32.totalorder %s38, 0
      %p166 = por %p164, %p165
      %p167 = scmp.ne.s32.totalorder %s159, %s161
      %p168 = scmp.eq.s32.totalorder %s43, 1
      %p169 = por %p167, %p168
      %p170 = scmp.ne.s32.totalorder %s161, %s162
      %p171 = scmp.eq.s32.totalorder %s43, 0
      %p172 = por %p170, %p171
      %p173 = scmp.ne.s32.totalorder %s161, %s162
      %p174 = scmp.eq.s32.totalorder %s44, 1
      %p175 = por %p173, %p174
      %p177 = scmp.ne.s32.totalorder %s162, %s176
      %p178 = scmp.eq.s32.totalorder %s44, 0
      %p179 = por %p177, %p178
      %s181 = sadd.s32 %s180, 1
      %p184 = scmp.eq.s32.totalorder %s38, 1
      %p185 = scmp.ne.s32.totalorder %s180, %s182
      %p186 = scmp.eq.s32.totalorder %s38, 0
      %p187 = por %p185, %p186
      %p188 = scmp.ne.s32.totalorder %s180, %s182
      %p189 = scmp.eq.s32.totalorder %s43, 1
      %p190 = por %p188, %p189
      %p191 = scmp.ne.s32.totalorder %s182, %s183
      %p192 = scmp.eq.s32.totalorder %s43, 0
      %p193 = por %p191, %p192
      %p194 = scmp.ne.s32.totalorder %s182, %s183
      %p195 = scmp.eq.s32.totalorder %s44, 1
      %p196 = por %p194, %p195
      %p198 = scmp.ne.s32.totalorder %s183, %s197
      %p199 = scmp.eq.s32.totalorder %s44, 0
      %p200 = por %p198, %p199
      %s202 = sadd.s32 %s201, 1
      %p205 = scmp.eq.s32.totalorder %s38, 1
      %p206 = scmp.ne.s32.totalorder %s201, %s203
      %p207 = scmp.eq.s32.totalorder %s38, 0
      %p208 = por %p206, %p207
      %p209 = scmp.ne.s32.totalorder %s201, %s203
      %p210 = scmp.eq.s32.totalorder %s43, 1
      %p211 = por %p209, %p210
      %p212 = scmp.ne.s32.totalorder %s203, %s204
      %p213 = scmp.eq.s32.totalorder %s43, 0
      %p214 = por %p212, %p213
      %p215 = scmp.ne.s32.totalorder %s203, %s204
      %p216 = scmp.eq.s32.totalorder %s44, 1
      %p217 = por %p215, %p216
      %p219 = scmp.ne.s32.totalorder %s204, %s218
      %p220 = scmp.eq.s32.totalorder %s44, 0
      %p221 = por %p219, %p220
      %s223 = sadd.s32 %s222, 1
      %p226 = scmp.eq.s32.totalorder %s38, 1
      %p227 = scmp.ne.s32.totalorder %s222, %s224
      %p228 = scmp.eq.s32.totalorder %s38, 0
      %p229 = por %p227, %p228
      %p230 = scmp.ne.s32.totalorder %s222, %s224
      %p231 = scmp.eq.s32.totalorder %s43, 1
      %p232 = por %p230, %p231
      %p233 = scmp.ne.s32.totalorder %s224, %s225
      %p234 = scmp.eq.s32.totalorder %s43, 0
      %p235 = por %p233, %p234
      %p236 = scmp.ne.s32.totalorder %s224, %s225
      %p237 = scmp.eq.s32.totalorder %s44, 1
      %p238 = por %p236, %p237
      %p240 = scmp.ne.s32.totalorder %s225, %s239
      %p241 = scmp.eq.s32.totalorder %s44, 0
      %p242 = por %p240, %p241
      %s244 = sadd.s32 %s243, 1
      %p247 = scmp.eq.s32.totalorder %s38, 1
      %p248 = scmp.ne.s32.totalorder %s243, %s245
      %p249 = scmp.eq.s32.totalorder %s38, 0
      %p250 = por %p248, %p249
      %p251 = scmp.ne.s32.totalorder %s243, %s245
      %p252 = scmp.eq.s32.totalorder %s43, 1
      %p253 = por %p251, %p252
      %p254 = scmp.ne.s32.totalorder %s245, %s246
      %p255 = scmp.eq.s32.totalorder %s43, 0
      %p256 = por %p254, %p255
      %p257 = scmp.ne.s32.totalorder %s245, %s246
      %p258 = scmp.eq.s32.totalorder %s44, 1
      %p259 = por %p257, %p258
      %p261 = scmp.ne.s32.totalorder %s246, %s260
      %p262 = scmp.eq.s32.totalorder %s44, 0
      %p263 = por %p261, %p262
      %s265 = sadd.s32 %s264, 1
      %p268 = scmp.eq.s32.totalorder %s38, 1
      %p269 = scmp.ne.s32.totalorder %s264, %s266
      %p270 = scmp.eq.s32.totalorder %s38, 0
      %p271 = por %p269, %p270
      %p272 = scmp.ne.s32.totalorder %s264, %s266
      %p273 = scmp.eq.s32.totalorder %s43, 1
      %p274 = por %p272, %p273
      %p275 = scmp.ne.s32.totalorder %s266, %s267
      %p276 = scmp.eq.s32.totalorder %s43, 0
      %p277 = por %p275, %p276
      %p278 = scmp.ne.s32.totalorder %s266, %s267
      %p279 = scmp.eq.s32.totalorder %s44, 1
      %p280 = por %p278, %p279
      %p282 = scmp.ne.s32.totalorder %s267, %s281
      %p283 = scmp.eq.s32.totalorder %s44, 0
      %p284 = por %p282, %p283
      %s286 = sadd.s32 %s285, 1
      %p289 = scmp.eq.s32.totalorder %s38, 1
      %p290 = scmp.ne.s32.totalorder %s285, %s287
      %p291 = scmp.eq.s32.totalorder %s38, 0
      %p292 = por %p290, %p291
      %p293 = scmp.ne.s32.totalorder %s285, %s287
      %p294 = scmp.eq.s32.totalorder %s43, 1
      %p295 = por %p293, %p294
      %p296 = scmp.ne.s32.totalorder %s287, %s288
      %p297 = scmp.eq.s32.totalorder %s43, 0
      %p298 = por %p296, %p297
      %p299 = scmp.ne.s32.totalorder %s287, %s288
      %p300 = scmp.eq.s32.totalorder %s44, 1
      %p301 = por %p299, %p300
      %p303 = scmp.ne.s32.totalorder %s288, %s302
      %p304 = scmp.eq.s32.totalorder %s44, 0
      %p305 = por %p303, %p304
      %s307 = sadd.s32 %s306, 1
      %p310 = scmp.eq.s32.totalorder %s38, 1
      %p311 = scmp.ne.s32.totalorder %s306, %s308
      %p312 = scmp.eq.s32.totalorder %s38, 0
      %p313 = por %p311, %p312
      %p314 = scmp.ne.s32.totalorder %s306, %s308
      %p315 = scmp.eq.s32.totalorder %s43, 1
      %p316 = por %p314, %p315
      %p317 = scmp.ne.s32.totalorder %s308, %s309
      %p318 = scmp.eq.s32.totalorder %s43, 0
      %p319 = por %p317, %p318
      %p320 = scmp.ne.s32.totalorder %s308, %s309
      %p321 = scmp.eq.s32.totalorder %s44, 1
      %p322 = por %p320, %p321
      %p324 = scmp.ne.s32.totalorder %s309, %s323
      %p325 = scmp.eq.s32.totalorder %s44, 0
      %p326 = por %p324, %p325
      %s328 = sadd.s32 %s327, 1
      %p331 = scmp.eq.s32.totalorder %s38, 1
      %p332 = scmp.ne.s32.totalorder %s327, %s329
      %p333 = scmp.eq.s32.totalorder %s38, 0
      %p334 = por %p332, %p333
      %p335 = scmp.ne.s32.totalorder %s327, %s329
      %p336 = scmp.eq.s32.totalorder %s43, 1
      %p337 = por %p335, %p336
      %p338 = scmp.ne.s32.totalorder %s329, %s330
      %p339 = scmp.eq.s32.totalorder %s43, 0
      %p340 = por %p338, %p339
      %p341 = scmp.ne.s32.totalorder %s329, %s330
      %p342 = scmp.eq.s32.totalorder %s44, 1
      %p343 = por %p341, %p342
      %p345 = scmp.ne.s32.totalorder %s330, %s344
      %p346 = scmp.eq.s32.totalorder %s44, 0
      %p347 = por %p345, %p346
      %s349 = sadd.s32 %s348, 1
      %p352 = scmp.eq.s32.totalorder %s38, 1
      %p353 = scmp.ne.s32.totalorder %s348, %s350
      %p354 = scmp.eq.s32.totalorder %s38, 0
      %p355 = por %p353, %p354
      %p356 = scmp.ne.s32.totalorder %s348, %s350
      %p357 = scmp.eq.s32.totalorder %s43, 1
      %p358 = por %p356, %p357
      %p359 = scmp.ne.s32.totalorder %s350, %s351
      %p360 = scmp.eq.s32.totalorder %s43, 0
      %p361 = por %p359, %p360
      %p362 = scmp.ne.s32.totalorder %s350, %s351
      %p363 = scmp.eq.s32.totalorder %s44, 1
      %p364 = por %p362, %p363
      %p366 = scmp.ne.s32.totalorder %s351, %s365
      %p367 = scmp.eq.s32.totalorder %s44, 0
      %p368 = por %p366, %p367
      %s370 = sadd.s32 %s369, 1
      %p373 = scmp.eq.s32.totalorder %s38, 1
      %p374 = scmp.ne.s32.totalorder %s369, %s371
      %p375 = scmp.eq.s32.totalorder %s38, 0
      %p376 = por %p374, %p375
      %p377 = scmp.ne.s32.totalorder %s369, %s371
      %p378 = scmp.eq.s32.totalorder %s43, 1
      %p379 = por %p377, %p378
      %p380 = scmp.ne.s32.totalorder %s371, %s372
      %p381 = scmp.eq.s32.totalorder %s43, 0
      %p382 = por %p380, %p381
      %p383 = scmp.ne.s32.totalorder %s371, %s372
      %p384 = scmp.eq.s32.totalorder %s44, 1
      %p385 = por %p383, %p384
      %p387 = scmp.ne.s32.totalorder %s372, %s386
      %p388 = scmp.eq.s32.totalorder %s44, 0
      %p389 = por %p387, %p388
      %s391 = sadd.s32 %s390, 1
      %p394 = scmp.eq.s32.totalorder %s38, 1
      %p395 = scmp.ne.s32.totalorder %s390, %s392
      %p396 = scmp.eq.s32.totalorder %s38, 0
      %p397 = por %p395, %p396
      %p398 = scmp.ne.s32.totalorder %s390, %s392
      %p399 = scmp.eq.s32.totalorder %s43, 1
      %p400 = por %p398, %p399
      %p401 = scmp.ne.s32.totalorder %s392, %s393
      %p402 = scmp.eq.s32.totalorder %s43, 0
      %p403 = por %p401, %p402
      %p404 = scmp.ne.s32.totalorder %s392, %s393
      %p405 = scmp.eq.s32.totalorder %s44, 1
      %p406 = por %p404, %p405
      %p408 = scmp.ne.s32.totalorder %s393, %s407
      %p409 = scmp.eq.s32.totalorder %s44, 0
      %p410 = por %p408, %p409
      %s412 = sadd.s32 %s411, 1
      %p415 = scmp.eq.s32.totalorder %s38, 1
      %p416 = scmp.ne.s32.totalorder %s411, %s413
      %p417 = scmp.eq.s32.totalorder %s38, 0
      %p418 = por %p416, %p417
      %p419 = scmp.ne.s32.totalorder %s411, %s413
      %p420 = scmp.eq.s32.totalorder %s43, 1
      %p421 = por %p419, %p420
      %p422 = scmp.ne.s32.totalorder %s413, %s414
      %p423 = scmp.eq.s32.totalorder %s43, 0
      %p424 = por %p422, %p423
      %p425 = scmp.ne.s32.totalorder %s413, %s414
      %p426 = scmp.eq.s32.totalorder %s44, 1
      %p427 = por %p425, %p426
      %p429 = scmp.ne.s32.totalorder %s414, %s428
      %p430 = scmp.eq.s32.totalorder %s44, 0
      %p431 = por %p429, %p430
      %s433 = sadd.s32 %s432, 1
      %p436 = scmp.eq.s32.totalorder %s38, 1
      %p437 = scmp.ne.s32.totalorder %s432, %s434
      %p438 = scmp.eq.s32.totalorder %s38, 0
      %p439 = por %p437, %p438
      %p440 = scmp.ne.s32.totalorder %s432, %s434
      %p441 = scmp.eq.s32.totalorder %s43, 1
      %p442 = por %p440, %p441
      %p443 = scmp.ne.s32.totalorder %s434, %s435
      %p444 = scmp.eq.s32.totalorder %s43, 0
      %p445 = por %p443, %p444
      %p446 = scmp.ne.s32.totalorder %s434, %s435
      %p447 = scmp.eq.s32.totalorder %s44, 1
      %p448 = por %p446, %p447
      %p450 = scmp.ne.s32.totalorder %s435, %s449
      %p451 = scmp.eq.s32.totalorder %s44, 0
      %p452 = por %p450, %p451
      %s454 = sadd.s32 %s453, 1
      %p457 = scmp.eq.s32.totalorder %s38, 1
      %p458 = scmp.ne.s32.totalorder %s453, %s455
      %p459 = scmp.eq.s32.totalorder %s38, 0
      %p460 = por %p458, %p459
      %p461 = scmp.ne.s32.totalorder %s453, %s455
      %p462 = scmp.eq.s32.totalorder %s43, 1
      %p463 = por %p461, %p462
      %p464 = scmp.ne.s32.totalorder %s455, %s456
      %p465 = scmp.eq.s32.totalorder %s43, 0
      %p466 = por %p464, %p465
      %p467 = scmp.ne.s32.totalorder %s455, %s456
      %p468 = scmp.eq.s32.totalorder %s44, 1
      %p469 = por %p467, %p468
      %p471 = scmp.ne.s32.totalorder %s456, %s470
      %p472 = scmp.eq.s32.totalorder %s44, 0
      %p473 = por %p471, %p472
      %s474 = ssub.s32 %s45, %s57
      %s475 = ssub.s32 %s46, %s53
      %s476 = sor.u32 %s474, %s475
      %p477 = scmp.eq.s32.totalorder %s476, 0
      %s479 = sadd.s32 %s478, 1
      %s480 = scalar_select %p477, %s478, %s479
      %p483 = pneg %p477
      %p484 = scmp.eq.s32.totalorder %s38, 1
      %p485 = por %p483, %p484
      %p486 = scmp.ne.s32.totalorder %s478, %s481
      %p487 = scmp.eq.s32.totalorder %s38, 0
      %p488 = por %p486, %p487
      %p489 = scmp.ne.s32.totalorder %s478, %s481
      %p490 = scmp.eq.s32.totalorder %s43, 1
      %p491 = por %p489, %p490
      %p492 = scmp.ne.s32.totalorder %s481, %s482
      %p493 = scmp.eq.s32.totalorder %s43, 0
      %p494 = por %p492, %p493
      %p495 = scmp.ne.s32.totalorder %s481, %s482
      %p496 = scmp.eq.s32.totalorder %s44, 1
      %p497 = por %p495, %p496
      %p499 = scmp.ne.s32.totalorder %s482, %s498
      %p500 = scmp.eq.s32.totalorder %s44, 0
      %p501 = por %p499, %p500
      %p502 = scmp.le.s32.totalorder 1, %s38
      %p503 = scmp.lt.s32.totalorder %s38, 3
      %p504 = pnand %p502, %p503
      %p505 = pneg %p504
      // Predicated region
      $region9: #{tpu_custom_call.1} parent=5 // pred_check
        _
      $region10: #{tpu_custom_call.1} parent=5 // pred_check_branch
        %507 = sbr.rel (%p504) target = $region12
      $region11: #{tpu_custom_call.1} parent=5 // pred_region
        %s508 = ssub.s32 %s38, 1
        // Predicated region
        $region13: #{tpu_custom_call.1} parent=11 // pred_check
          %p509 = pneg %p151
        $region14: #{tpu_custom_call.1} parent=11 // pred_check_branch
          %511 = sbr.rel (%p509) target = $region16
        $region15: #{tpu_custom_call.1} parent=11 // pred_region
          %513 = vsyncadd [#allocation9], 0
          %s515 = sshll.u32 %s3, 4
          %s516 = int_to_ptr.hbm [resolvable:$true] %s515
          %s517 = sshll.u32 [#allocation8], 4
          %s518 = int_to_ptr.vmem [resolvable:$true] %s517
          %520 = dma.hbm_to_vmem [thread:$0]  %s516, 16, %s518, [#allocation9]
        $region16: #{tpu_custom_call.1} parent=11 // pred_fallthru
          _
        // Predicated region
        $region17: #{tpu_custom_call.1} parent=11 // pred_check
          %p521 = pneg %p172
        $region18: #{tpu_custom_call.1} parent=11 // pred_check_branch
          %523 = sbr.rel (%p521) target = $region20
        $region19: #{tpu_custom_call.1} parent=11 // pred_region
          %525 = vsyncadd [#allocation9], 0
          %s527 = sshll.u32 %s4, 4
          %s528 = int_to_ptr.hbm [resolvable:$true] %s527
          %s529 = sshll.u32 [#allocation10], 4
          %s530 = int_to_ptr.vmem [resolvable:$true] %s529
          %532 = dma.hbm_to_vmem [thread:$0]  %s528, 16, %s530, [#allocation9]
        $region20: #{tpu_custom_call.1} parent=11 // pred_fallthru
          _
        // Predicated region
        $region21: #{tpu_custom_call.1} parent=11 // pred_check
          %p533 = pneg %p193
        $region22: #{tpu_custom_call.1} parent=11 // pred_check_branch
          %535 = sbr.rel (%p533) target = $region24
        $region23: #{tpu_custom_call.1} parent=11 // pred_region
          %537 = vsyncadd [#allocation12], 0
          %s539 = sshll.u32 %s5, 4
          %s540 = int_to_ptr.hbm [resolvable:$true] %s539
          %s541 = sshll.u32 [#allocation11], 4
          %s542 = int_to_ptr.vmem [resolvable:$true] %s541
          %544 = dma.hbm_to_vmem [thread:$0]  %s540, 16, %s542, [#allocation12]
        $region24: #{tpu_custom_call.1} parent=11 // pred_fallthru
          _
        // Predicated region
        $region25: #{tpu_custom_call.1} parent=11 // pred_check
          %p545 = pneg %p214
        $region26: #{tpu_custom_call.1} parent=11 // pred_check_branch
          %547 = sbr.rel (%p545) target = $region28
        $region27: #{tpu_custom_call.1} parent=11 // pred_region
          %549 = vsyncadd [#allocation12], 0
          %s551 = sshll.u32 %s6, 4
          %s552 = int_to_ptr.hbm [resolvable:$true] %s551
          %s553 = sshll.u32 [#allocation13], 4
          %s554 = int_to_ptr.vmem [resolvable:$true] %s553
          %556 = dma.hbm_to_vmem [thread:$0]  %s552, 16, %s554, [#allocation12]
        $region28: #{tpu_custom_call.1} parent=11 // pred_fallthru
          _
        // Predicated region
        $region29: #{tpu_custom_call.1} parent=11 // pred_check
          %p557 = pneg %p235
        $region30: #{tpu_custom_call.1} parent=11 // pred_check_branch
          %559 = sbr.rel (%p557) target = $region32
        $region31: #{tpu_custom_call.1} parent=11 // pred_region
          _
        $region32: #{tpu_custom_call.1} parent=11 // pred_fallthru
          _
        // Predicated region
        $region33: #{tpu_custom_call.1} parent=11 // pred_check
          %p560 = pneg %p256
        $region34: #{tpu_custom_call.1} parent=11 // pred_check_branch
          %562 = sbr.rel (%p560) target = $region36
        $region35: #{tpu_custom_call.1} parent=11 // pred_region
          %564 = vsyncadd [#allocation15], 0
          %s566 = sshll.u32 %s8, 4
          %s567 = int_to_ptr.hbm [resolvable:$true] %s566
          %s568 = sshll.u32 [#allocation14], 4
          %s569 = int_to_ptr.vmem [resolvable:$true] %s568
          %571 = dma.hbm_to_vmem [thread:$0]  %s567, 16, %s569, [#allocation15]
        $region36: #{tpu_custom_call.1} parent=11 // pred_fallthru
          _
        // Predicated region
        $region37: #{tpu_custom_call.1} parent=11 // pred_check
          %p572 = pneg %p277
        $region38: #{tpu_custom_call.1} parent=11 // pred_check_branch
          %574 = sbr.rel (%p572) target = $region40
        $region39: #{tpu_custom_call.1} parent=11 // pred_region
          %576 = vsyncadd [#allocation15], 0
          %s577 = sshll.u32 %s9, 4
          %s578 = int_to_ptr.hbm [resolvable:$true] %s577
          %s579 = sshll.u32 [#allocation16], 4
          %s580 = int_to_ptr.vmem [resolvable:$true] %s579
          %585 = dma.hbm_to_vmem [thread:$0]  %s578, 256, %s580, [#allocation15], 64, 64, 4
        $region40: #{tpu_custom_call.1} parent=11 // pred_fallthru
          _
        // Predicated region
        $region41: #{tpu_custom_call.1} parent=11 // pred_check
          %p586 = pneg %p298
        $region42: #{tpu_custom_call.1} parent=11 // pred_check_branch
          %588 = sbr.rel (%p586) target = $region44
        $region43: #{tpu_custom_call.1} parent=11 // pred_region
          %590 = vsyncadd [#allocation18], 0
          %s592 = sshll.u32 %s10, 4
          %s593 = int_to_ptr.hbm [resolvable:$true] %s592
          %s594 = sshll.u32 [#allocation17], 4
          %s595 = int_to_ptr.vmem [resolvable:$true] %s594
          %597 = dma.hbm_to_vmem [thread:$0]  %s593, 16, %s595, [#allocation18]
        $region44: #{tpu_custom_call.1} parent=11 // pred_fallthru
          _
        // Predicated region
        $region45: #{tpu_custom_call.1} parent=11 // pred_check
          %p598 = pneg %p319
        $region46: #{tpu_custom_call.1} parent=11 // pred_check_branch
          %600 = sbr.rel (%p598) target = $region48
        $region47: #{tpu_custom_call.1} parent=11 // pred_region
          %602 = vsyncadd [#allocation18], 0
          %s603 = sshll.u32 %s11, 4
          %s604 = int_to_ptr.hbm [resolvable:$true] %s603
          %s605 = sshll.u32 [#allocation19], 4
          %s606 = int_to_ptr.vmem [resolvable:$true] %s605
          %611 = dma.hbm_to_vmem [thread:$0]  %s604, 256, %s606, [#allocation18], 64, 64, 4
        $region48: #{tpu_custom_call.1} parent=11 // pred_fallthru
          _
        // Predicated region
        $region49: #{tpu_custom_call.1} parent=11 // pred_check
          %p612 = pneg %p340
        $region50: #{tpu_custom_call.1} parent=11 // pred_check_branch
          %614 = sbr.rel (%p612) target = $region52
        $region51: #{tpu_custom_call.1} parent=11 // pred_region
          %616 = vsyncadd [#allocation21], 0
          %s618 = sshll.u32 %s12, 4
          %s619 = int_to_ptr.hbm [resolvable:$true] %s618
          %s620 = sshll.u32 [#allocation20], 4
          %s621 = int_to_ptr.vmem [resolvable:$true] %s620
          %623 = dma.hbm_to_vmem [thread:$0]  %s619, 16, %s621, [#allocation21]
        $region52: #{tpu_custom_call.1} parent=11 // pred_fallthru
          _
        // Predicated region
        $region53: #{tpu_custom_call.1} parent=11 // pred_check
          %p624 = pneg %p361
        $region54: #{tpu_custom_call.1} parent=11 // pred_check_branch
          %626 = sbr.rel (%p624) target = $region56
        $region55: #{tpu_custom_call.1} parent=11 // pred_region
          %628 = vsyncadd [#allocation21], 0
          %s629 = sshll.u32 %s13, 4
          %s630 = int_to_ptr.hbm [resolvable:$true] %s629
          %s631 = sshll.u32 [#allocation22], 4
          %s632 = int_to_ptr.vmem [resolvable:$true] %s631
          %637 = dma.hbm_to_vmem [thread:$0]  %s630, 256, %s632, [#allocation21], 64, 64, 4
        $region56: #{tpu_custom_call.1} parent=11 // pred_fallthru
          _
        // Predicated region
        $region57: #{tpu_custom_call.1} parent=11 // pred_check
          %p638 = pneg %p382
        $region58: #{tpu_custom_call.1} parent=11 // pred_check_branch
          %640 = sbr.rel (%p638) target = $region60
        $region59: #{tpu_custom_call.1} parent=11 // pred_region
          %642 = vsyncadd [#allocation24], 0
          %s644 = sshll.u32 %s14, 4
          %s645 = int_to_ptr.hbm [resolvable:$true] %s644
          %s646 = sshll.u32 [#allocation23], 4
          %s647 = int_to_ptr.vmem [resolvable:$true] %s646
          %649 = dma.hbm_to_vmem [thread:$0]  %s645, 16, %s647, [#allocation24]
        $region60: #{tpu_custom_call.1} parent=11 // pred_fallthru
          _
        // Predicated region
        $region61: #{tpu_custom_call.1} parent=11 // pred_check
          %p650 = pneg %p403
        $region62: #{tpu_custom_call.1} parent=11 // pred_check_branch
          %652 = sbr.rel (%p650) target = $region64
        $region63: #{tpu_custom_call.1} parent=11 // pred_region
          %654 = vsyncadd [#allocation24], 0
          %s655 = sshll.u32 %s15, 4
          %s656 = int_to_ptr.hbm [resolvable:$true] %s655
          %s657 = sshll.u32 [#allocation25], 4
          %s658 = int_to_ptr.vmem [resolvable:$true] %s657
          %663 = dma.hbm_to_vmem [thread:$0]  %s656, 256, %s658, [#allocation24], 64, 64, 4
        $region64: #{tpu_custom_call.1} parent=11 // pred_fallthru
          _
        // Predicated region
        $region65: #{tpu_custom_call.1} parent=11 // pred_check
          %p664 = pneg %p424
        $region66: #{tpu_custom_call.1} parent=11 // pred_check_branch
          %666 = sbr.rel (%p664) target = $region68
        $region67: #{tpu_custom_call.1} parent=11 // pred_region
          %668 = vsyncadd [#allocation27], 0
          %s670 = sshll.u32 %s16, 4
          %s671 = int_to_ptr.hbm [resolvable:$true] %s670
          %s672 = sshll.u32 [#allocation26], 4
          %s673 = int_to_ptr.vmem [resolvable:$true] %s672
          %675 = dma.hbm_to_vmem [thread:$0]  %s671, 16, %s673, [#allocation27]
        $region68: #{tpu_custom_call.1} parent=11 // pred_fallthru
          _
        // Predicated region
        $region69: #{tpu_custom_call.1} parent=11 // pred_check
          %p676 = pneg %p445
        $region70: #{tpu_custom_call.1} parent=11 // pred_check_branch
          %678 = sbr.rel (%p676) target = $region72
        $region71: #{tpu_custom_call.1} parent=11 // pred_region
          _
        $region72: #{tpu_custom_call.1} parent=11 // pred_fallthru
          _
        // Predicated region
        $region73: #{tpu_custom_call.1} parent=11 // pred_check
          %p679 = pneg %p466
        $region74: #{tpu_custom_call.1} parent=11 // pred_check_branch
          %681 = sbr.rel (%p679) target = $region76
        $region75: #{tpu_custom_call.1} parent=11 // pred_region
          _
        $region76: #{tpu_custom_call.1} parent=11 // pred_fallthru
          _
      $region12: #{tpu_custom_call.1} parent=5 // pred_fallthru
        _
      %p682 = scmp.lt.s32.totalorder %s38, 2
      // Predicated region
      $region77: #{tpu_custom_call.1} parent=5 // pred_check
        %p683 = pneg %p682
      $region78: #{tpu_custom_call.1} parent=5 // pred_check_branch
        %685 = sbr.rel (%p683) target = $region80
      $region79: #{tpu_custom_call.1} parent=5 // pred_region
        // Predicated region
        $region81: #{tpu_custom_call.1} parent=79 // pred_check
          %p686 = pneg %p70
        $region82: #{tpu_custom_call.1} parent=79 // pred_check_branch
          %688 = sbr.rel (%p686) target = $region84
        $region83: #{tpu_custom_call.1} parent=79 // pred_region
          %p689 = scmp.lt.s32.totalorder %s45, 1
          %s690 = scalar_select %p689, %s45, 1
          %s691 = smul.addr %s690, 8
          %s692 = scalar_lea.vmem %s0, %s691
        $region84: #{tpu_custom_call.1} parent=79 // pred_fallthru
          _
        // Predicated region
        $region85: #{tpu_custom_call.1} parent=79 // pred_check
          %p693 = pneg %p98
        $region86: #{tpu_custom_call.1} parent=79 // pred_check_branch
          %695 = sbr.rel (%p693) target = $region88
        $region87: #{tpu_custom_call.1} parent=79 // pred_region
          %p696 = scmp.lt.s32.totalorder %s45, 1
          %s697 = scalar_select %p696, %s45, 1
          %p698 = scmp.lt.s32.totalorder %s46, 0
          %s699 = scalar_select %p698, %s46, 0
          %s700 = sadd.s32 %s699, %s697
          %s701 = smul.addr %s700, 8
          %s702 = scalar_lea.vmem %s1, %s701
        $region88: #{tpu_custom_call.1} parent=79 // pred_fallthru
          _
        // Predicated region
        $region89: #{tpu_custom_call.1} parent=79 // pred_check
          %p703 = pneg %p124
        $region90: #{tpu_custom_call.1} parent=79 // pred_check_branch
          %705 = sbr.rel (%p703) target = $region92
        $region91: #{tpu_custom_call.1} parent=79 // pred_region
          %s706 = sand.u32 %s114, 1
          %s707 = scalar_lea.sflag [#allocation6], %s706
          %s708 = sand.u32 %s114, 1
          %s709 = scalar_lea.vmem [#allocation5], %s708
          %711 = vsyncadd %s707, 0
          %s712 = scalar_lea.hbm %s2, %s45
          %s714 = sshll.u32 %s712, 4
          %s715 = int_to_ptr.hbm [resolvable:$true] %s714
          %s716 = sshll.u32 %s709, 4
          %s717 = int_to_ptr.vmem [resolvable:$true] %s716
          %719 = dma.hbm_to_vmem [thread:$0]  %s715, 16, %s717, %s707
        $region92: #{tpu_custom_call.1} parent=79 // pred_fallthru
          _
      $region80: #{tpu_custom_call.1} parent=5 // pred_fallthru
        _
      %p720 = scmp.le.s32.totalorder 1, %s38
      %p721 = scmp.lt.s32.totalorder %s38, 3
      %p722 = pnand %p720, %p721
      %p723 = pneg %p722
      // Predicated region
      $region93: #{tpu_custom_call.1} parent=5 // pred_check
        _
      $region94: #{tpu_custom_call.1} parent=5 // pred_check_branch
        %725 = sbr.rel (%p722) target = $region96
      $region95: #{tpu_custom_call.1} parent=5 // pred_region
        %s726 = ssub.s32 %s38, 1
        %s727 = sand.u32 %s117, 1
        %s728 = scalar_lea.sflag [#allocation6], %s727
        %s729 = sand.u32 %s117, 1
        %s730 = scalar_lea.vmem [#allocation5], %s729
        // Predicated region
        $region97: #{tpu_custom_call.1} parent=95 // pred_check
          %p731 = pneg %p130
        $region98: #{tpu_custom_call.1} parent=95 // pred_check_branch
          %733 = sbr.rel (%p731) target = $region100
        $region99: #{tpu_custom_call.1} parent=95 // pred_region
          %735 = dma.done %s728, 16
        $region100: #{tpu_custom_call.1} parent=95 // pred_fallthru
          _
        // Predicated region
        $region101: #{tpu_custom_call.1} parent=95 // pred_check
          %p736 = pneg %p151
        $region102: #{tpu_custom_call.1} parent=95 // pred_check_branch
          %738 = sbr.rel (%p736) target = $region104
        $region103: #{tpu_custom_call.1} parent=95 // pred_region
          %740 = dma.done [#allocation9], 16
        $region104: #{tpu_custom_call.1} parent=95 // pred_fallthru
          _
        // Predicated region
        $region105: #{tpu_custom_call.1} parent=95 // pred_check
          %p741 = pneg %p172
        $region106: #{tpu_custom_call.1} parent=95 // pred_check_branch
          %743 = sbr.rel (%p741) target = $region108
        $region107: #{tpu_custom_call.1} parent=95 // pred_region
          %745 = dma.done [#allocation9], 16
        $region108: #{tpu_custom_call.1} parent=95 // pred_fallthru
          _
        // Predicated region
        $region109: #{tpu_custom_call.1} parent=95 // pred_check
          %p746 = pneg %p193
        $region110: #{tpu_custom_call.1} parent=95 // pred_check_branch
          %748 = sbr.rel (%p746) target = $region112
        $region111: #{tpu_custom_call.1} parent=95 // pred_region
          %750 = dma.done [#allocation12], 16
        $region112: #{tpu_custom_call.1} parent=95 // pred_fallthru
          _
        // Predicated region
        $region113: #{tpu_custom_call.1} parent=95 // pred_check
          %p751 = pneg %p214
        $region114: #{tpu_custom_call.1} parent=95 // pred_check_branch
          %753 = sbr.rel (%p751) target = $region116
        $region115: #{tpu_custom_call.1} parent=95 // pred_region
          %755 = dma.done [#allocation12], 16
        $region116: #{tpu_custom_call.1} parent=95 // pred_fallthru
          _
        // Predicated region
        $region117: #{tpu_custom_call.1} parent=95 // pred_check
          %p756 = pneg %p256
        $region118: #{tpu_custom_call.1} parent=95 // pred_check_branch
          %758 = sbr.rel (%p756) target = $region120
        $region119: #{tpu_custom_call.1} parent=95 // pred_region
          %760 = dma.done [#allocation15], 16
        $region120: #{tpu_custom_call.1} parent=95 // pred_fallthru
          _
        // Predicated region
        $region121: #{tpu_custom_call.1} parent=95 // pred_check
          %p761 = pneg %p277
        $region122: #{tpu_custom_call.1} parent=95 // pred_check_branch
          %763 = sbr.rel (%p761) target = $region124
        $region123: #{tpu_custom_call.1} parent=95 // pred_region
          %765 = dma.done [#allocation15], 256
        $region124: #{tpu_custom_call.1} parent=95 // pred_fallthru
          _
        // Predicated region
        $region125: #{tpu_custom_call.1} parent=95 // pred_check
          %p766 = pneg %p298
        $region126: #{tpu_custom_call.1} parent=95 // pred_check_branch
          %768 = sbr.rel (%p766) target = $region128
        $region127: #{tpu_custom_call.1} parent=95 // pred_region
          %770 = dma.done [#allocation18], 16
        $region128: #{tpu_custom_call.1} parent=95 // pred_fallthru
          _
        // Predicated region
        $region129: #{tpu_custom_call.1} parent=95 // pred_check
          %p771 = pneg %p319
        $region130: #{tpu_custom_call.1} parent=95 // pred_check_branch
          %773 = sbr.rel (%p771) target = $region132
        $region131: #{tpu_custom_call.1} parent=95 // pred_region
          %775 = dma.done [#allocation18], 256
        $region132: #{tpu_custom_call.1} parent=95 // pred_fallthru
          _
        // Predicated region
        $region133: #{tpu_custom_call.1} parent=95 // pred_check
          %p776 = pneg %p340
        $region134: #{tpu_custom_call.1} parent=95 // pred_check_branch
          %778 = sbr.rel (%p776) target = $region136
        $region135: #{tpu_custom_call.1} parent=95 // pred_region
          %780 = dma.done [#allocation21], 16
        $region136: #{tpu_custom_call.1} parent=95 // pred_fallthru
          _
        // Predicated region
        $region137: #{tpu_custom_call.1} parent=95 // pred_check
          %p781 = pneg %p361
        $region138: #{tpu_custom_call.1} parent=95 // pred_check_branch
          %783 = sbr.rel (%p781) target = $region140
        $region139: #{tpu_custom_call.1} parent=95 // pred_region
          %785 = dma.done [#allocation21], 256
        $region140: #{tpu_custom_call.1} parent=95 // pred_fallthru
          _
        // Predicated region
        $region141: #{tpu_custom_call.1} parent=95 // pred_check
          %p786 = pneg %p382
        $region142: #{tpu_custom_call.1} parent=95 // pred_check_branch
          %788 = sbr.rel (%p786) target = $region144
        $region143: #{tpu_custom_call.1} parent=95 // pred_region
          %790 = dma.done [#allocation24], 16
        $region144: #{tpu_custom_call.1} parent=95 // pred_fallthru
          _
        // Predicated region
        $region145: #{tpu_custom_call.1} parent=95 // pred_check
          %p791 = pneg %p403
        $region146: #{tpu_custom_call.1} parent=95 // pred_check_branch
          %793 = sbr.rel (%p791) target = $region148
        $region147: #{tpu_custom_call.1} parent=95 // pred_region
          %795 = dma.done [#allocation24], 256
        $region148: #{tpu_custom_call.1} parent=95 // pred_fallthru
          _
        // Predicated region
        $region149: #{tpu_custom_call.1} parent=95 // pred_check
          %p796 = pneg %p424
        $region150: #{tpu_custom_call.1} parent=95 // pred_check_branch
          %798 = sbr.rel (%p796) target = $region152
        $region151: #{tpu_custom_call.1} parent=95 // pred_region
          %800 = dma.done [#allocation27], 16
        $region152: #{tpu_custom_call.1} parent=95 // pred_fallthru
          _
        %p801 = scmp.lt.s32.totalorder %s47, 1
        %s802 = scalar_select %p801, %s47, 1
        %s803 = smul.addr %s802, 8
        %s804 = scalar_lea.vmem %s0, %s803
        %p805 = pneg %p76
        %p806 = pneg %p73
        %p807 = scmp.lt.s32.totalorder %s47, 1
        %s808 = scalar_select %p807, %s47, 1
        %p809 = scmp.lt.s32.totalorder %s48, 0
        %s810 = scalar_select %p809, %s48, 0
        %s811 = sadd.s32 %s810, %s808
        %s812 = smul.addr %s811, 8
        %s813 = scalar_lea.vmem %s1, %s812
        %p814 = pneg %p104
        %p815 = pneg %p101
        %s816 = sand.u32 %s117, 1
        %s817 = scalar_lea.sflag [#allocation6], %s816
        %s818 = sand.u32 %s117, 1
        %s819 = scalar_lea.vmem [#allocation5], %s818
        %p820 = pneg %p130
        %p821 = pneg %p127
        %p822 = pneg %p151
        %p823 = pneg %p148
        %p824 = pneg %p172
        %p825 = pneg %p169
        %p826 = pneg %p193
        %p827 = pneg %p190
        %p828 = pneg %p214
        %p829 = pneg %p211
        %p830 = pneg %p235
        %p831 = pneg %p232
        %p832 = pneg %p256
        %p833 = pneg %p253
        %p834 = pneg %p277
        %p835 = pneg %p274
        %p836 = pneg %p298
        %p837 = pneg %p295
        %p838 = pneg %p319
        %p839 = pneg %p316
        %p840 = pneg %p340
        %p841 = pneg %p337
        %p842 = pneg %p361
        %p843 = pneg %p358
        %p844 = pneg %p382
        %p845 = pneg %p379
        %p846 = pneg %p403
        %p847 = pneg %p400
        %p848 = pneg %p424
        %p849 = pneg %p421
        %p850 = pneg %p445
        %p851 = pneg %p442
        %p852 = pneg %p466
        %p853 = pneg %p463
        %p854 = pneg %p494
        %p855 = pneg %p491
        %s856 = sand.u32 %s481, 1
        %s857 = scalar_lea.sflag [#allocation7], %s856
        %s858 = sand.u32 %s481, 1
        %s859 = smul.addr %s858, 8
        %s860 = scalar_lea.vmem [#allocation28], %s859
        %p861 = scmp.lt.s32.totalorder %s47, 1
        %s862 = scalar_select %p861, %s47, 1
        %s863 = smul.addr %s862, 8
        %s864 = scalar_lea.vmem %s0, %s863
        %p865 = scmp.lt.s32.totalorder %s47, 1
        %s866 = scalar_select %p865, %s47, 1
        %p867 = scmp.lt.s32.totalorder %s48, 0
        %s868 = scalar_select %p867, %s48, 0
        %s869 = sadd.s32 %s868, %s866
        %s870 = smul.addr %s869, 8
        %s871 = scalar_lea.vmem %s1, %s870
        %p873 = scmp.eq.s32.totalorder %s48, 0
        // Predicated region
        $region153: #{tpu_custom_call.1} parent=95 // pred_check
          %p874 = pneg %p873
        $region154: #{tpu_custom_call.1} parent=95 // pred_check_branch
          %876 = sbr.rel (%p874) target = $region156
        $region155: #{tpu_custom_call.1} parent=95 // pred_region
          %v877 = vld [vmem:[%s864] sm:$0xff]
          %vm878 = vcmask 261120
          %v879 = vsel %vm878, %v877, 0.0
          %880 = vadd.xlane.f32.xlu0 %v879
          %v881 = vpop.xlane.xlu0 %880
          %v882 = vrcp.pop 32.0
          %v883 = vmul.f32 32.0, %v882
          %v884 = vsub.f32 1.0, %v883
          %v885 = vmul.f32 %v882, %v884
          %v886 = vadd.f32 %v882, %v885
          %vm887 = vweird.f32 %v882
          %v888 = vsel %vm887, %v882, %v886
          %v889 = vmul.f32 %v881, %v888
          %v890 = vsub.f32 %v877, %v889
          %v891 = vmul.f32 %v890, %v890
          %v892 = vsel %vm878, %v891, 0.0
          %893 = vadd.xlane.f32.xlu0 %v892
          %v894 = vpop.xlane.xlu0 %893
          %v895 = vrcp.pop 31.0
          %v896 = vmul.f32 31.0, %v895
          %v897 = vsub.f32 1.0, %v896
          %v898 = vmul.f32 %v895, %v897
          %v899 = vadd.f32 %v895, %v898
          %vm900 = vweird.f32 %v895
          %v901 = vsel %vm900, %v895, %v899
          %v902 = vmul.f32 %v894, %v901
          %v903 = vrsqrt.pop %v902
          %v904 = vmul.f32 %v903, %v902
          %v905 = vmul.f32 %v904, %v903
          %v906 = vmul.f32 0.5, %v905
          %v907 = vsub.f32 1.5, %v906
          %v908 = vmul.f32 %v903, %v907
          %v909 = vmul.f32 %v902, %v908
          %vm910 = vcmp.eq.f32.partialorder %v902, inf
          %v911 = vsel %vm910, %v902, %v909
          %vm912 = vcmp.eq.f32.partialorder %v902, 0.0
          %v913 = vand.u32 %v902, 2147483648
          %v914 = vsel %vm912, %v913, %v911
          %v915 = vadd.f32 %v914, 1e-06
          %v916 = vrcp.pop %v915
          %v917 = vld [vmem:[#allocation8] sm:$0x1]
          %v919 = vperm.slane %v917, 0
          %v921 = vmul.f32 %v919, %v890
          %v922 = vmul.f32 %v921, %v916
          %v923 = vld [vmem:[#allocation10] sm:$0x1]
          %v925 = vperm.slane %v923, 0
          %v927 = vadd.f32 %v922, %v925
          %v928 = vpack.c.bf16 %v927, %v927
          %v929 = vld [vmem:[#allocation16] sm:$0xf]
          %v930 = vld [vmem:[#allocation16 + $0x4] sm:$0xf]
          %v931 = vld [vmem:[#allocation16 + $0x8] sm:$0xf]
          %v932 = vld [vmem:[#allocation16 + $0xc] sm:$0xf]
          %v933 = vld [vmem:[#allocation17] sm:$0x1]
          %v935 = vperm.slane %v933, 0
          %v941 = vunpack.c.l.b16 %v929
          %v942 = vunpack.c.l.b16 %v930
          %v943 = vunpack.c.l.b16 %v931
          %v944 = vunpack.c.l.b16 %v932
          %v945 = vpack.c.b16 %v942, %v941
          %v946 = vpack.c.b16 %v944, %v943
          %v950 = vsel %vm878, %v928, 0
          %952 = vmatpush.bf16.msra.mxu0 0
          %953 = vmatpush.bf16.msra.mxu0 0
          %954 = vmatpush.bf16.msra.mxu0 0
          %955 = vmatpush.bf16.msra.mxu0 0
          %956 = vmatpush.bf16.msra.mxu0 0
          %957 = vmatpush.bf16.msra.mxu0 0
          %958 = vmatpush.bf16.msra.mxu0 %v946
          %959 = vmatpush.bf16.msra.mxu0 %v945
          %960 = vmatmul.bf16.gmra.mxu0 %v950
          %v961 = vpop.f32.mrf.mxu0
          %v962 = vadd.f32 %v935, %v961
          %v963 = vpop.f32.mrf.mxu0
          %964 = vdwg.mxu0
          %v965 = vpack.c.bf16 %v962, %v962
          %vm966 = vcmask 257024
          %967 = vst.msk [vmem:[#allocation2] sm:$0xf] %vm966, %v965
          %v968 = vld [vmem:[#allocation19] sm:$0xf]
          %v969 = vld [vmem:[#allocation19 + $0x4] sm:$0xf]
          %v970 = vld [vmem:[#allocation19 + $0x8] sm:$0xf]
          %v971 = vld [vmem:[#allocation19 + $0xc] sm:$0xf]
          %v972 = vld [vmem:[#allocation20] sm:$0x1]
          %v974 = vperm.slane %v972, 0
          %v980 = vunpack.c.l.b16 %v968
          %v981 = vunpack.c.l.b16 %v969
          %v982 = vunpack.c.l.b16 %v970
          %v983 = vunpack.c.l.b16 %v971
          %v984 = vpack.c.b16 %v981, %v980
          %v985 = vpack.c.b16 %v983, %v982
          %988 = vmatpush.bf16.msra.mxu0 0
          %989 = vmatpush.bf16.msra.mxu0 0
          %990 = vmatpush.bf16.msra.mxu0 0
          %991 = vmatpush.bf16.msra.mxu0 0
          %992 = vmatpush.bf16.msra.mxu0 0
          %993 = vmatpush.bf16.msra.mxu0 0
          %994 = vmatpush.bf16.msra.mxu0 %v985
          %995 = vmatpush.bf16.msra.mxu0 %v984
          %996 = vmatmul.bf16.gmra.mxu0 %v950
          %v997 = vpop.f32.mrf.mxu0
          %v998 = vadd.f32 %v974, %v997
          %v999 = vpop.f32.mrf.mxu0
          %1000 = vdwg.mxu0
          %v1001 = vpack.c.bf16 %v998, %v998
          %1002 = vst.msk [vmem:[#allocation3] sm:$0xf] %vm966, %v1001
        $region156: #{tpu_custom_call.1} parent=95 // pred_fallthru
          _
        %v1003 = vld [vmem:[%s871] sm:$0xff]
        %vm1004 = vcmask 261120
        %v1005 = vsel %vm1004, %v1003, 0.0
        %1006 = vadd.xlane.f32.xlu0 %v1005
        %v1007 = vpop.xlane.xlu0 %1006
        %v1008 = vrcp.pop 32.0
        %v1009 = vmul.f32 32.0, %v1008
        %v1010 = vsub.f32 1.0, %v1009
        %v1011 = vmul.f32 %v1008, %v1010
        %v1012 = vadd.f32 %v1008, %v1011
        %vm1013 = vweird.f32 %v1008
        %v1014 = vsel %vm1013, %v1008, %v1012
        %v1015 = vmul.f32 %v1007, %v1014
        %v1016 = vsub.f32 %v1003, %v1015
        %v1017 = vmul.f32 %v1016, %v1016
        %v1018 = vsel %vm1004, %v1017, 0.0
        %1019 = vadd.xlane.f32.xlu0 %v1018
        %v1020 = vpop.xlane.xlu0 %1019
        %v1021 = vrcp.pop 31.0
        %v1022 = vmul.f32 31.0, %v1021
        %v1023 = vsub.f32 1.0, %v1022
        %v1024 = vmul.f32 %v1021, %v1023
        %v1025 = vadd.f32 %v1021, %v1024
        %vm1026 = vweird.f32 %v1021
        %v1027 = vsel %vm1026, %v1021, %v1025
        %v1028 = vmul.f32 %v1020, %v1027
        %v1029 = vrsqrt.pop %v1028
        %v1030 = vmul.f32 %v1029, %v1028
        %v1031 = vmul.f32 %v1030, %v1029
        %v1032 = vmul.f32 0.5, %v1031
        %v1033 = vsub.f32 1.5, %v1032
        %v1034 = vmul.f32 %v1029, %v1033
        %v1035 = vmul.f32 %v1028, %v1034
        %vm1036 = vcmp.eq.f32.partialorder %v1028, inf
        %v1037 = vsel %vm1036, %v1028, %v1035
        %vm1038 = vcmp.eq.f32.partialorder %v1028, 0.0
        %v1039 = vand.u32 %v1028, 2147483648
        %v1040 = vsel %vm1038, %v1039, %v1037
        %v1041 = vadd.f32 %v1040, 1e-06
        %v1042 = vrcp.pop %v1041
        %v1043 = vld [vmem:[#allocation8] sm:$0x1]
        %v1045 = vperm.slane %v1043, 0
        %v1047 = vmul.f32 %v1045, %v1016
        %v1048 = vmul.f32 %v1047, %v1042
        %v1049 = vld [vmem:[#allocation10] sm:$0x1]
        %v1051 = vperm.slane %v1049, 0
        %v1053 = vadd.f32 %v1048, %v1051
        %v1054 = vpack.c.bf16 %v1053, %v1053
        %v1055 = vld [vmem:[%s7] sm:$0xf]
        %v1056 = vld [vmem:[%s7 + $0x4] sm:$0xf]
        %v1057 = vld [vmem:[%s7 + $0x8] sm:$0xf]
        %v1058 = vld [vmem:[%s7 + $0xc] sm:$0xf]
        %v1059 = vld [vmem:[#allocation14] sm:$0x1]
        %v1061 = vperm.slane %v1059, 0
        %v1067 = vunpack.c.l.b16 %v1055
        %v1068 = vunpack.c.l.b16 %v1056
        %v1069 = vunpack.c.l.b16 %v1057
        %v1070 = vunpack.c.l.b16 %v1058
        %v1071 = vpack.c.b16 %v1068, %v1067
        %v1072 = vpack.c.b16 %v1070, %v1069
        %v1076 = vsel %vm1004, %v1054, 0
        %1078 = vmatpush.bf16.msra.mxu0 0
        %1079 = vmatpush.bf16.msra.mxu0 0
        %1080 = vmatpush.bf16.msra.mxu0 0
        %1081 = vmatpush.bf16.msra.mxu0 0
        %1082 = vmatpush.bf16.msra.mxu0 0
        %1083 = vmatpush.bf16.msra.mxu0 0
        %1084 = vmatpush.bf16.msra.mxu0 %v1072
        %1085 = vmatpush.bf16.msra.mxu0 %v1071
        %1086 = vmatmul.bf16.gmra.mxu0 %v1076
        %v1087 = vpop.f32.mrf.mxu0
        %v1088 = vadd.f32 %v1061, %v1087
        %v1089 = vpop.f32.mrf.mxu0
        %1090 = vdwg.mxu0
        %v1091 = vmul.f32 %v1088, 0.35355338
        %v1092 = vpack.c.bf16 %v1091, %v1091
        %v1093 = vld [vmem:[%s730] sm:$0x1]
        %vm1094 = vcmp.eq.f32.partialorder %v1093, 0.0
        %v1095 = vsel %vm1094, -1e+09, 0.0
        %v1096 = vld [vmem:[#allocation2] sm:$0xf]
        %v1098 = vperm.slane %v1095, 0
        %vm1100 = vcmask 64512
        %v1102 = vsel %vm1100, %v1092, 0
        %v1105 = vsel %vm1100, %v1096, 0
        %1107 = vmatpush.bf16.xpose.msra.mxu0 0
        %1108 = vmatpush.bf16.xpose.msra.mxu0 0
        %1109 = vmatpush.bf16.xpose.msra.mxu0 0
        %1110 = vmatpush.bf16.xpose.msra.mxu0 0
        %1111 = vmatpush.bf16.xpose.msra.mxu0 0
        %1112 = vmatpush.bf16.xpose.msra.mxu0 0
        %1113 = vmatpush.bf16.xpose.msra.mxu0 0
        %1114 = vmatpush.bf16.xpose.msra.mxu0 %v1105
        %1115 = vmatmul.bf16.gmra.mxu0 %v1102
        %v1116 = vpop.f32.mrf.mxu0
        %v1117 = vadd.f32 %v1098, %v1116
        %v1118 = vpop.f32.mrf.mxu0
        %1119 = vdwg.mxu0
        %v1120 = vsel %vm1100, %v1117, -inf
        %1121 = vmax.xlane.f32.xlu0 %v1120
        %v1122 = vpop.xlane.xlu0 %1121
        %v1123 = vsub.f32 %v1117, %v1122
        %v1124 = vmul.f32 %v1123, 1.442695
        %v1125 = vpow.pop %v1124
        %v1126 = vsel %vm1100, %v1125, 0.0
        %1127 = vadd.xlane.f32.xlu0 %v1126
        %v1128 = vpop.xlane.xlu0 %1127
        %v1129 = vrcp.pop %v1128
        %v1130 = vmul.f32 %v1125, %v1129
        %v1131 = vpack.c.bf16 %v1130, %v1130
        %v1132 = vld [vmem:[#allocation3] sm:$0xf]
        %v1134 = vsel %vm1100, %v1131, 0
        %vm1136 = vcmask 1043456
        %v1138 = vsel %vm1136, %v1132, 0
        %1140 = vmatpush.bf16.msra.mxu0 0
        %1141 = vmatpush.bf16.msra.mxu0 0
        %1142 = vmatpush.bf16.msra.mxu0 0
        %1143 = vmatpush.bf16.msra.mxu0 0
        %1144 = vmatpush.bf16.msra.mxu0 0
        %1145 = vmatpush.bf16.msra.mxu0 0
        %1146 = vmatpush.bf16.msra.mxu0 0
        %1147 = vmatpush.bf16.msra.mxu0 %v1138
        %1148 = vmatmul.bf16.gmra.mxu0 %v1134
        %v1149 = vpop.f32.mrf.mxu0
        %v1150 = vadd.f32 0.0, %v1149
        %v1151 = vpop.f32.mrf.mxu0
        %1152 = vdwg.mxu0
        %1153 = vst.msk [vmem:[#allocation4] sm:$0xff] %vm1100, %v1150
        %v1154 = vld [vmem:[#allocation2] sm:$0xf]
        %v1156 = vunpack.c.l.b16 %v1092
        %v1157 = vpack.c.b16 %v1156, %v1156
        %1158 = vrot.lane.b32.xlu0 %v1157, 120
        %v1159 = vpop.permute.xlu0 %1158
        %v1161 = vunpack.c.l.b16 %v1154
        %v1162 = vpack.c.b16 %v1161, %v1161
        %1163 = vrot.lane.b32.xlu0 %v1162, 120
        %v1164 = vpop.permute.xlu0 %1163
        %v1166 = vsel %vm1100, %v1159, 0
        %v1169 = vsel %vm1100, %v1164, 0
        %1171 = vmatpush.bf16.xpose.msra.mxu0 0
        %1172 = vmatpush.bf16.xpose.msra.mxu0 0
        %1173 = vmatpush.bf16.xpose.msra.mxu0 0
        %1174 = vmatpush.bf16.xpose.msra.mxu0 0
        %1175 = vmatpush.bf16.xpose.msra.mxu0 0
        %1176 = vmatpush.bf16.xpose.msra.mxu0 0
        %1177 = vmatpush.bf16.xpose.msra.mxu0 0
        %1178 = vmatpush.bf16.xpose.msra.mxu0 %v1169
        %1179 = vmatmul.bf16.gmra.mxu0 %v1166
        %v1180 = vpop.f32.mrf.mxu0
        %v1181 = vadd.f32 %v1098, %v1180
        %v1182 = vpop.f32.mrf.mxu0
        %1183 = vdwg.mxu0
        %v1184 = vsel %vm1100, %v1181, -inf
        %1185 = vmax.xlane.f32.xlu0 %v1184
        %v1186 = vpop.xlane.xlu0 %1185
        %v1187 = vsub.f32 %v1181, %v1186
        %v1188 = vmul.f32 %v1187, 1.442695
        %v1189 = vpow.pop %v1188
        %v1190 = vsel %vm1100, %v1189, 0.0
        %1191 = vadd.xlane.f32.xlu0 %v1190
        %v1192 = vpop.xlane.xlu0 %1191
        %v1193 = vrcp.pop %v1192
        %v1194 = vmul.f32 %v1189, %v1193
        %v1195 = vpack.c.bf16 %v1194, %v1194
        %v1196 = vld [vmem:[#allocation3] sm:$0xf]
        %v1198 = vunpack.c.l.b16 %v1196
        %v1199 = vpack.c.b16 %v1198, %v1198
        %1200 = vrot.lane.b32.xlu0 %v1199, 120
        %v1201 = vpop.permute.xlu0 %1200
        %v1203 = vsel %vm1100, %v1195, 0
        %v1206 = vsel %vm1136, %v1201, 0
        %1208 = vmatpush.bf16.msra.mxu0 0
        %1209 = vmatpush.bf16.msra.mxu0 0
        %1210 = vmatpush.bf16.msra.mxu0 0
        %1211 = vmatpush.bf16.msra.mxu0 0
        %1212 = vmatpush.bf16.msra.mxu0 0
        %1213 = vmatpush.bf16.msra.mxu0 0
        %1214 = vmatpush.bf16.msra.mxu0 0
        %1215 = vmatpush.bf16.msra.mxu0 %v1206
        %1216 = vmatmul.bf16.gmra.mxu0 %v1203
        %v1217 = vpop.f32.mrf.mxu0
        %v1218 = vadd.f32 0.0, %v1217
        %v1219 = vpop.f32.mrf.mxu0
        %1220 = vdwg.mxu0
        %1222 = vrot.lane.b32.xlu0 %v1218, 8
        %v1223 = vpop.permute.xlu0 %1222
        %vm1225 = vcmask 130112
        %1226 = vst.msk [vmem:[#allocation4] sm:$0xff] %vm1225, %v1223
        %v1227 = vld [vmem:[#allocation2] sm:$0xf]
        %1228 = vrot.lane.b32.xlu0 %v1157, 112
        %v1229 = vpop.permute.xlu0 %1228
        %v1231 = vunpack.c.l.b16 %v1227
        %v1232 = vpack.c.b16 %v1231, %v1231
        %1233 = vrot.lane.b32.xlu0 %v1232, 112
        %v1234 = vpop.permute.xlu0 %1233
        %v1236 = vsel %vm1100, %v1229, 0
        %v1239 = vsel %vm1100, %v1234, 0
        %1241 = vmatpush.bf16.xpose.msra.mxu0 0
        %1242 = vmatpush.bf16.xpose.msra.mxu0 0
        %1243 = vmatpush.bf16.xpose.msra.mxu0 0
        %1244 = vmatpush.bf16.xpose.msra.mxu0 0
        %1245 = vmatpush.bf16.xpose.msra.mxu0 0
        %1246 = vmatpush.bf16.xpose.msra.mxu0 0
        %1247 = vmatpush.bf16.xpose.msra.mxu0 0
        %1248 = vmatpush.bf16.xpose.msra.mxu0 %v1239
        %1249 = vmatmul.bf16.gmra.mxu0 %v1236
        %v1250 = vpop.f32.mrf.mxu0
        %v1251 = vadd.f32 %v1098, %v1250
        %v1252 = vpop.f32.mrf.mxu0
        %1253 = vdwg.mxu0
        %v1254 = vsel %vm1100, %v1251, -inf
        %1255 = vmax.xlane.f32.xlu0 %v1254
        %v1256 = vpop.xlane.xlu0 %1255
        %v1257 = vsub.f32 %v1251, %v1256
        %v1258 = vmul.f32 %v1257, 1.442695
        %v1259 = vpow.pop %v1258
        %v1260 = vsel %vm1100, %v1259, 0.0
        %1261 = vadd.xlane.f32.xlu0 %v1260
        %v1262 = vpop.xlane.xlu0 %1261
        %v1263 = vrcp.pop %v1262
        %v1264 = vmul.f32 %v1259, %v1263
        %v1265 = vpack.c.bf16 %v1264, %v1264
        %v1266 = vld [vmem:[#allocation3] sm:$0xf]
        %v1268 = vunpack.c.l.b16 %v1266
        %v1269 = vpack.c.b16 %v1268, %v1268
        %1270 = vrot.lane.b32.xlu0 %v1269, 112
        %v1271 = vpop.permute.xlu0 %1270
        %v1273 = vsel %vm1100, %v1265, 0
        %v1276 = vsel %vm1136, %v1271, 0
        %1278 = vmatpush.bf16.msra.mxu0 0
        %1279 = vmatpush.bf16.msra.mxu0 0
        %1280 = vmatpush.bf16.msra.mxu0 0
        %1281 = vmatpush.bf16.msra.mxu0 0
        %1282 = vmatpush.bf16.msra.mxu0 0
        %1283 = vmatpush.bf16.msra.mxu0 0
        %1284 = vmatpush.bf16.msra.mxu0 0
        %1285 = vmatpush.bf16.msra.mxu0 %v1276
        %1286 = vmatmul.bf16.gmra.mxu0 %v1273
        %v1287 = vpop.f32.mrf.mxu0
        %v1288 = vadd.f32 0.0, %v1287
        %v1289 = vpop.f32.mrf.mxu0
        %1290 = vdwg.mxu0
        %1292 = vrot.lane.b32.xlu0 %v1288, 16
        %v1293 = vpop.permute.xlu0 %1292
        %vm1295 = vcmask 195712
        %1296 = vst.msk [vmem:[#allocation4] sm:$0xff] %vm1295, %v1293
        %v1297 = vld [vmem:[#allocation2] sm:$0xf]
        %1298 = vrot.lane.b32.xlu0 %v1157, 104
        %v1299 = vpop.permute.xlu0 %1298
        %v1301 = vunpack.c.l.b16 %v1297
        %v1302 = vpack.c.b16 %v1301, %v1301
        %1303 = vrot.lane.b32.xlu0 %v1302, 104
        %v1304 = vpop.permute.xlu0 %1303
        %v1306 = vsel %vm1100, %v1299, 0
        %v1309 = vsel %vm1100, %v1304, 0
        %1311 = vmatpush.bf16.xpose.msra.mxu0 0
        %1312 = vmatpush.bf16.xpose.msra.mxu0 0
        %1313 = vmatpush.bf16.xpose.msra.mxu0 0
        %1314 = vmatpush.bf16.xpose.msra.mxu0 0
        %1315 = vmatpush.bf16.xpose.msra.mxu0 0
        %1316 = vmatpush.bf16.xpose.msra.mxu0 0
        %1317 = vmatpush.bf16.xpose.msra.mxu0 0
        %1318 = vmatpush.bf16.xpose.msra.mxu0 %v1309
        %1319 = vmatmul.bf16.gmra.mxu0 %v1306
        %v1320 = vpop.f32.mrf.mxu0
        %v1321 = vadd.f32 %v1098, %v1320
        %v1322 = vpop.f32.mrf.mxu0
        %1323 = vdwg.mxu0
        %v1324 = vsel %vm1100, %v1321, -inf
        %1325 = vmax.xlane.f32.xlu0 %v1324
        %v1326 = vpop.xlane.xlu0 %1325
        %v1327 = vsub.f32 %v1321, %v1326
        %v1328 = vmul.f32 %v1327, 1.442695
        %v1329 = vpow.pop %v1328
        %v1330 = vsel %vm1100, %v1329, 0.0
        %1331 = vadd.xlane.f32.xlu0 %v1330
        %v1332 = vpop.xlane.xlu0 %1331
        %v1333 = vrcp.pop %v1332
        %v1334 = vmul.f32 %v1329, %v1333
        %v1335 = vpack.c.bf16 %v1334, %v1334
        %v1336 = vld [vmem:[#allocation3] sm:$0xf]
        %v1338 = vunpack.c.l.b16 %v1336
        %v1339 = vpack.c.b16 %v1338, %v1338
        %1340 = vrot.lane.b32.xlu0 %v1339, 104
        %v1341 = vpop.permute.xlu0 %1340
        %v1343 = vsel %vm1100, %v1335, 0
        %v1346 = vsel %vm1136, %v1341, 0
        %1348 = vmatpush.bf16.msra.mxu0 0
        %1349 = vmatpush.bf16.msra.mxu0 0
        %1350 = vmatpush.bf16.msra.mxu0 0
        %1351 = vmatpush.bf16.msra.mxu0 0
        %1352 = vmatpush.bf16.msra.mxu0 0
        %1353 = vmatpush.bf16.msra.mxu0 0
        %1354 = vmatpush.bf16.msra.mxu0 0
        %1355 = vmatpush.bf16.msra.mxu0 %v1346
        %1356 = vmatmul.bf16.gmra.mxu0 %v1343
        %v1357 = vpop.f32.mrf.mxu0
        %v1358 = vadd.f32 0.0, %v1357
        %v1359 = vpop.f32.mrf.mxu0
        %1360 = vdwg.mxu0
        %1362 = vrot.lane.b32.xlu0 %v1358, 24
        %v1363 = vpop.permute.xlu0 %1362
        %vm1365 = vcmask 261312
        %1366 = vst.msk [vmem:[#allocation4] sm:$0xff] %vm1365, %v1363
        %v1367 = vld [vmem:[#allocation4] sm:$0xff]
        %v1368 = vpack.c.bf16 %v1367, %v1367
        %v1369 = vld [vmem:[#allocation22] sm:$0xf]
        %v1370 = vld [vmem:[#allocation22 + $0x4] sm:$0xf]
        %v1371 = vld [vmem:[#allocation22 + $0x8] sm:$0xf]
        %v1372 = vld [vmem:[#allocation22 + $0xc] sm:$0xf]
        %v1373 = vld [vmem:[#allocation23] sm:$0x1]
        %v1375 = vperm.slane %v1373, 0
        %v1381 = vunpack.c.l.b16 %v1369
        %v1382 = vunpack.c.l.b16 %v1370
        %v1383 = vunpack.c.l.b16 %v1371
        %v1384 = vunpack.c.l.b16 %v1372
        %v1385 = vpack.c.b16 %v1382, %v1381
        %v1386 = vpack.c.b16 %v1384, %v1383
        %v1390 = vsel %vm1004, %v1368, 0
        %1392 = vmatpush.bf16.msra.mxu0 0
        %1393 = vmatpush.bf16.msra.mxu0 0
        %1394 = vmatpush.bf16.msra.mxu0 0
        %1395 = vmatpush.bf16.msra.mxu0 0
        %1396 = vmatpush.bf16.msra.mxu0 0
        %1397 = vmatpush.bf16.msra.mxu0 0
        %1398 = vmatpush.bf16.msra.mxu0 %v1386
        %1399 = vmatpush.bf16.msra.mxu0 %v1385
        %1400 = vmatmul.bf16.gmra.mxu0 %v1390
        %v1401 = vpop.f32.mrf.mxu0
        %v1402 = vadd.f32 %v1375, %v1401
        %v1403 = vpop.f32.mrf.mxu0
        %1404 = vdwg.mxu0
        %v1405 = vadd.f32 %v1003, %v1402
        %v1406 = vsel %vm1004, %v1405, 0.0
        %1407 = vadd.xlane.f32.xlu0 %v1406
        %v1408 = vpop.xlane.xlu0 %1407
        %v1409 = vmul.f32 %v1408, %v1014
        %v1410 = vsub.f32 %v1405, %v1409
        %v1411 = vmul.f32 %v1410, %v1410
        %v1412 = vsel %vm1004, %v1411, 0.0
        %1413 = vadd.xlane.f32.xlu0 %v1412
        %v1414 = vpop.xlane.xlu0 %1413
        %v1415 = vmul.f32 %v1414, %v1027
        %v1416 = vrsqrt.pop %v1415
        %v1417 = vmul.f32 %v1416, %v1415
        %v1418 = vmul.f32 %v1417, %v1416
        %v1419 = vmul.f32 0.5, %v1418
        %v1420 = vsub.f32 1.5, %v1419
        %v1421 = vmul.f32 %v1416, %v1420
        %v1422 = vmul.f32 %v1415, %v1421
        %vm1423 = vcmp.eq.f32.partialorder %v1415, inf
        %v1424 = vsel %vm1423, %v1415, %v1422
        %vm1425 = vcmp.eq.f32.partialorder %v1415, 0.0
        %v1426 = vand.u32 %v1415, 2147483648
        %v1427 = vsel %vm1425, %v1426, %v1424
        %v1428 = vadd.f32 %v1427, 1e-06
        %v1429 = vrcp.pop %v1428
        %v1430 = vld [vmem:[#allocation11] sm:$0x1]
        %v1432 = vperm.slane %v1430, 0
        %v1434 = vmul.f32 %v1432, %v1410
        %v1435 = vmul.f32 %v1434, %v1429
        %v1436 = vld [vmem:[#allocation13] sm:$0x1]
        %v1438 = vperm.slane %v1436, 0
        %v1440 = vadd.f32 %v1435, %v1438
        %v1441 = vpack.c.bf16 %v1440, %v1440
        %v1442 = vld [vmem:[#allocation25] sm:$0xf]
        %v1443 = vld [vmem:[#allocation25 + $0x4] sm:$0xf]
        %v1444 = vld [vmem:[#allocation25 + $0x8] sm:$0xf]
        %v1445 = vld [vmem:[#allocation25 + $0xc] sm:$0xf]
        %v1446 = vld [vmem:[#allocation26] sm:$0x1]
        %v1448 = vperm.slane %v1446, 0
        %v1454 = vunpack.c.l.b16 %v1442
        %v1455 = vunpack.c.l.b16 %v1443
        %v1456 = vunpack.c.l.b16 %v1444
        %v1457 = vunpack.c.l.b16 %v1445
        %v1458 = vpack.c.b16 %v1455, %v1454
        %v1459 = vpack.c.b16 %v1457, %v1456
        %v1463 = vsel %vm1004, %v1441, 0
        %1465 = vmatpush.bf16.msra.mxu0 0
        %1466 = vmatpush.bf16.msra.mxu0 0
        %1467 = vmatpush.bf16.msra.mxu0 0
        %1468 = vmatpush.bf16.msra.mxu0 0
        %1469 = vmatpush.bf16.msra.mxu0 0
        %1470 = vmatpush.bf16.msra.mxu0 0
        %1471 = vmatpush.bf16.msra.mxu0 %v1459
        %1472 = vmatpush.bf16.msra.mxu0 %v1458
        %1473 = vmatmul.bf16.gmra.mxu0 %v1463
        %v1474 = vpop.f32.mrf.mxu0
        %v1475 = vadd.f32 %v1448, %v1474
        %v1476 = vpop.f32.mrf.mxu0
        %1477 = vdwg.mxu0
        %v1478 = vmax.f32 %v1475, 0.0
        %v1479 = vpack.c.bf16 %v1478, %v1478
        %v1480 = vld [vmem:[%s17] sm:$0xf]
        %v1481 = vld [vmem:[%s17 + $0x4] sm:$0xf]
        %v1482 = vld [vmem:[%s17 + $0x8] sm:$0xf]
        %v1483 = vld [vmem:[%s17 + $0xc] sm:$0xf]
        %v1484 = vld [vmem:[%s17 + $0x10] sm:$0xf]
        %v1485 = vld [vmem:[%s17 + $0x14] sm:$0xf]
        %v1486 = vld [vmem:[%s17 + $0x18] sm:$0xf]
        %v1487 = vld [vmem:[%s17 + $0x1c] sm:$0xf]
        %v1488 = vld [vmem:[%s18] sm:$0x1]
        %v1490 = vperm.slane %v1488, 0
        %v1500 = vunpack.c.l.b16 %v1480
        %v1501 = vunpack.c.l.b16 %v1481
        %v1502 = vunpack.c.l.b16 %v1482
        %v1503 = vunpack.c.l.b16 %v1483
        %v1504 = vunpack.c.l.b16 %v1484
        %v1505 = vunpack.c.l.b16 %v1485
        %v1506 = vunpack.c.l.b16 %v1486
        %v1507 = vunpack.c.l.b16 %v1487
        %v1508 = vpack.c.b16 %v1501, %v1500
        %v1509 = vpack.c.b16 %v1503, %v1502
        %v1510 = vpack.c.b16 %v1505, %v1504
        %v1511 = vpack.c.b16 %v1507, %v1506
        %vm1516 = vcmask 523264
        %v1518 = vsel %vm1516, %v1479, 0
        %1520 = vmatpush.bf16.msra.mxu0 0
        %1521 = vmatpush.bf16.msra.mxu0 0
        %1522 = vmatpush.bf16.msra.mxu0 0
        %1523 = vmatpush.bf16.msra.mxu0 0
        %1524 = vmatpush.bf16.msra.mxu0 %v1511
        %1525 = vmatpush.bf16.msra.mxu0 %v1510
        %1526 = vmatpush.bf16.msra.mxu0 %v1509
        %1527 = vmatpush.bf16.msra.mxu0 %v1508
        %1528 = vmatmul.bf16.gmra.mxu0 %v1518
        %v1529 = vpop.f32.mrf.mxu0
        %v1530 = vadd.f32 %v1490, %v1529
        %v1531 = vpop.f32.mrf.mxu0
        %1532 = vdwg.mxu0
        %v1533 = vadd.f32 %v1405, %v1530
        %1534 = vst.msk [vmem:[%s860] sm:$0xff] %vm1004, %v1533
        %s1535 = sand.u32 %s481, 1
        %s1536 = scalar_lea.sflag [#allocation7], %s1535
        %s1537 = sand.u32 %s481, 1
        %s1538 = smul.addr %s1537, 8
        %s1539 = scalar_lea.vmem [#allocation28], %s1538
        // Predicated region
        $region157: #{tpu_custom_call.1} parent=95 // pred_check
          %p1540 = pneg %p491
        $region158: #{tpu_custom_call.1} parent=95 // pred_check_branch
          %1542 = sbr.rel (%p1540) target = $region160
        $region159: #{tpu_custom_call.1} parent=95 // pred_region
          %1544 = vsyncadd %s1536, 0
          %s1545 = sadd.s32 %s48, %s47
          %s1546 = smul.addr %s1545, 8
          %s1547 = scalar_lea.hbm %s19, %s1546
          %s1549 = sshll.u32 %s1539, 4
          %s1550 = int_to_ptr.vmem [resolvable:$true] %s1549
          %s1551 = sshll.u32 %s1547, 4
          %s1552 = int_to_ptr.hbm [resolvable:$true] %s1551
          %1554 = dma.vmem_to_hbm [thread:$0]  %s1550, 128, %s1552, %s1536
        $region160: #{tpu_custom_call.1} parent=95 // pred_fallthru
          _
      $region96: #{tpu_custom_call.1} parent=5 // pred_fallthru
        _
      %p1555 = scmp.le.s32.totalorder 2, %s38
      // Predicated region
      $region161: #{tpu_custom_call.1} parent=5 // pred_check
        %p1556 = pneg %p1555
      $region162: #{tpu_custom_call.1} parent=5 // pred_check_branch
        %1558 = sbr.rel (%p1556) target = $region164
      $region163: #{tpu_custom_call.1} parent=5 // pred_region
        %s1559 = ssub.s32 %s38, 2
        // Predicated region
        $region165: #{tpu_custom_call.1} parent=163 // pred_check
          %p1560 = pneg %p497
        $region166: #{tpu_custom_call.1} parent=163 // pred_check_branch
          %1562 = sbr.rel (%p1560) target = $region168
        $region167: #{tpu_custom_call.1} parent=163 // pred_region
          %s1563 = sand.u32 %s482, 1
          %s1564 = scalar_lea.sflag [#allocation7], %s1563
          %s1565 = sand.u32 %s482, 1
          %s1566 = smul.addr %s1565, 8
          %s1567 = scalar_lea.vmem [#allocation28], %s1566
          %1569 = dma.done %s1564, 128
        $region168: #{tpu_custom_call.1} parent=163 // pred_fallthru
          _
      $region164: #{tpu_custom_call.1} parent=5 // pred_fallthru
        _
    $region6: #{tpu_custom_call.1} parent=1 // loop_footer
      %s42 = sadd.s32 1, %s38
    $region7: #{tpu_custom_call.1} parent=1 // loop_footer_branch
      %37 = sbr.rel target = $region3
    $region8: #{tpu_custom_call.1} parent=1 // loop_exit
      _
    %1570 = vsyncpa [#allocation6], 1
    %s1571 = scalar_lea.sflag [#allocation6], 1
    %1572 = vsyncpa %s1571, 1
    %1573 = vsyncpa [#allocation9], 1
    %1574 = vsyncpa [#allocation12], 1
    %1575 = vsyncpa [#allocation15], 1
    %1576 = vsyncpa [#allocation18], 1
    %1577 = vsyncpa [#allocation21], 1
    %1578 = vsyncpa [#allocation24], 1
    %1579 = vsyncpa [#allocation27], 1
    %1580 = vsyncpa [#allocation7], 1
    %s1581 = scalar_lea.sflag [#allocation7], 1
    %1582 = vsyncpa %s1581, 1

</llo_original>
